<compile_context>
chip_gen: v6e
topology: v6e:2x2x1
jax: 0.10.0
libtpu: 0.0.40
codegen_flags: <defaults>
</compile_context>

<pallas_src>
import math

import jax
import jax.numpy as jnp
from jax.experimental import pallas as pl
from jax.experimental.pallas import tpu as pltpu


def _round_up(x, m):
    return ((x + m - 1) // m) * m


def mlp_kernel(x_ref, w1_ref, b1_ref, w2_ref, b2_ref, o_ref, acc_ref):
    k = pl.program_id(1)

    # Init the (tile_b, hidden) f32 accumulator on the first K step.
    @pl.when(k == 0)
    def _():
        acc_ref[...] = jnp.zeros_like(acc_ref)

    # Partial fc1: (tile_b, tile_k) @ (tile_k, hidden), f32 MXU accumulation.
    acc_ref[...] += jnp.dot(
        x_ref[...], w1_ref[...], preferred_element_type=jnp.float32
    )

    # Epilogue on the last K step: bias + ReLU + fc3 + bias into a lane-dense slab.
    @pl.when(k == pl.num_programs(1) - 1)
    def _():
        h = jnp.maximum(acc_ref[...] + b1_ref[...], 0.0)
        y = jnp.dot(
            h.astype(w2_ref.dtype), w2_ref[...], preferred_element_type=jnp.float32
        )
        y = y + b2_ref[...]
        o_ref[...] = y.astype(o_ref.dtype)


def mlp_forward(x, w1, b1, w2, b2, *, tile_b=None, tile_k=512):
    """x: (B, ...) arbitrary trailing dims, flattened like torch.flatten(x, 1)."""
    batch = x.shape[0]
    x_flat = x.reshape(batch, -1)
    input_dim = x_flat.shape[1]
    hidden_dim = w1.shape[1]
    output_dim = w2.shape[1]
    itemsize = jnp.dtype(x_flat.dtype).itemsize

    # --- tile sizing (sublane/lane aligned: valid on v5e/v6e/v7x) ---
    if tile_b is None:
        tile_b = min(_round_up(batch, 8), 256)        # sublane-aligned batch tile
    b_pad = _round_up(batch, tile_b)

    tile_k = min(tile_k, _round_up(input_dim, 128))   # lane-aligned K tile
    k_pad = _round_up(input_dim, tile_k)

    out_pad = max(_round_up(output_dim, 128), 128)    # lane-dense output slab

    # --- zero padding (exact: padded rows/cols contribute nothing) ---
    x_p = jnp.pad(x_flat, ((0, b_pad - batch), (0, k_pad - input_dim)))
    w1_p = jnp.pad(w1, ((0, k_pad - input_dim), (0, 0)))
    b1_2d = b1.reshape(1, hidden_dim)
    w2_p = jnp.pad(w2, ((0, 0), (0, out_pad - output_dim)))
    b2_2d = jnp.pad(b2.reshape(1, output_dim), ((0, 0), (0, out_pad - output_dim)))

    n_b = b_pad // tile_b
    n_k = k_pad // tile_k

    # VMEM budget: double-buffered x and W1 tiles, resident b1/W2/b2, double-
    # buffered output slab, plus the f32 accumulator scratch. Add headroom.
    vmem_bytes = (
        2 * tile_b * tile_k * itemsize            # x tiles
        + 2 * tile_k * hidden_dim * itemsize      # W1 tiles
        + hidden_dim * itemsize                   # b1
        + hidden_dim * out_pad * itemsize         # W2
        + out_pad * itemsize                      # b2
        + 2 * tile_b * out_pad * itemsize         # output slab
        + tile_b * hidden_dim * 4                 # f32 accumulator
    )
    vmem_limit = min(_round_up(vmem_bytes * 2, 1 << 20), 48 * 1024 * 1024)

    cost = pl.CostEstimate(
        flops=2 * batch * (input_dim * hidden_dim + hidden_dim * output_dim),
        transcendentals=0,
        bytes_accessed=itemsize
        * (x_p.size + w1_p.size + b1_2d.size + w2_p.size + b2_2d.size + b_pad * out_pad),
    )

    out = pl.pallas_call(
        mlp_kernel,
        out_shape=jax.ShapeDtypeStruct((b_pad, out_pad), x_flat.dtype),
        grid_spec=pltpu.PrefetchScalarGridSpec(
            num_scalar_prefetch=0,
            grid=(n_b, n_k),
            in_specs=[
                # x: tiled over (batch, K)
                pl.BlockSpec((tile_b, tile_k), lambda i, k: (i, k)),
                # W1: streamed over K, full hidden width
                pl.BlockSpec((tile_k, hidden_dim), lambda i, k: (k, 0)),
                # b1, W2, b2: resident (constant block index across the grid)
                pl.BlockSpec((1, hidden_dim), lambda i, k: (0, 0)),
                pl.BlockSpec((hidden_dim, out_pad), lambda i, k: (0, 0)),
                pl.BlockSpec((1, out_pad), lambda i, k: (0, 0)),
            ],
            out_specs=pl.BlockSpec((tile_b, out_pad), lambda i, k: (i, 0)),
            scratch_shapes=[pltpu.VMEM((tile_b, hidden_dim), jnp.float32)],
        ),
        compiler_params=pltpu.CompilerParams(
            dimension_semantics=("parallel", "arbitrary"),
            vmem_limit_bytes=int(vmem_limit),
        ),
        cost_estimate=cost,
    )(x_p, w1_p, b1_2d, w2_p, b2_2d)

    # Slice back to the true (B, output_dim) result.
    return out[:batch, :output_dim]


def init_mlp_params(key, input_dim, output_dim, hidden_dim):
    """Deterministic init mimicking torch.nn.Linear default (U[-1/sqrt(fan_in), +1/sqrt(fan_in)]).

    Weights returned pre-transposed: w1 (input_dim, hidden_dim), w2 (hidden_dim, output_dim).
    """
    k1, k2, k3, k4 = jax.random.split(key, 4)
    bound1 = 1.0 / math.sqrt(input_dim)
    bound2 = 1.0 / math.sqrt(hidden_dim)
    w1 = jax.random.uniform(k1, (input_dim, hidden_dim), jnp.float32, -bound1, bound1)
    b1 = jax.random.uniform(k2, (hidden_dim,), jnp.float32, -bound1, bound1)
    w2 = jax.random.uniform(k3, (hidden_dim, output_dim), jnp.float32, -bound2, bound2)
    b2 = jax.random.uniform(k4, (output_dim,), jnp.float32, -bound2, bound2)
    return w1, b1, w2, b2


if __name__ == "__main__":
    key = jax.random.PRNGKey(0)
    kx, kp = jax.random.split(key)

    # Example input consistent with the module: any tensor flattened from dim 1.
    B, C, H, W = 2, 4, 16, 16
    x = jax.random.normal(kx, (B, C, H, W), jnp.float32)

    input_dim = C * H * W          # 1024
    hidden_dim = 1024              # module default hidden_dim
    output_dim = 16

    w1, b1, w2, b2 = init_mlp_params(kp, input_dim, output_dim, hidden_dim)

    # TODO(synk): for bf16-friendly accuracy budgets, cast x/w1/w2 to bfloat16
    # (keep preferred_element_type=f32) to halve weight-DMA bytes on v6e/v7x.
    out = mlp_forward(x, w1, b1, w2, b2)
    out = jax.block_until_ready(out)

    # Pure-JAX reference of the same forward pass.
    x_flat = x.reshape(B, -1)
    ref = jnp.maximum(x_flat @ w1 + b1, 0.0) @ w2 + b2
    assert out.shape == (B, output_dim)
    assert jnp.allclose(out, ref, atol=1e-4, rtol=1e-4)

    print("KERNEL_OK")
</pallas_src>

<mosaic_0001>
module attributes {stable_mosaic.version = 11 : i64} {
  func.func @mlp_kernel(%arg0: i32, %arg1: i32, %arg2: memref<8x512xf32, #tpu.memory_space<vmem>>, %arg3: memref<512x1024xf32, #tpu.memory_space<vmem>>, %arg4: memref<1x1024xf32, #tpu.memory_space<vmem>>, %arg5: memref<1024x128xf32, #tpu.memory_space<vmem>>, %arg6: memref<1x128xf32, #tpu.memory_space<vmem>>, %arg7: memref<8x128xf32, #tpu.memory_space<vmem>>, %arg8: memref<8x1024xf32, #tpu.memory_space<vmem>>) attributes {dimension_semantics = [#tpu.dimension_semantics<parallel>, #tpu.dimension_semantics<arbitrary>], iteration_bounds = array<i64: 1, 2>, scalar_prefetch = 0 : i64, scratch_operands = 1 : i64, tpu.core_type = #tpu.core_type<tc>, window_params = [{transform_indices = @transform_0, window_bounds = array<i64: 8, 512>}, {transform_indices = @transform_1, window_bounds = array<i64: 512, 1024>}, {pipeline_mode = #tpu.pipeline_mode<synchronous>, transform_indices = @transform_2, window_bounds = array<i64: 1, 1024>}, {pipeline_mode = #tpu.pipeline_mode<synchronous>, transform_indices = @transform_3, window_bounds = array<i64: 1024, 128>}, {pipeline_mode = #tpu.pipeline_mode<synchronous>, transform_indices = @transform_4, window_bounds = array<i64: 1, 128>}, {transform_indices = @transform_5, window_bounds = array<i64: 8, 128>}]} {
    %c0_i32 = arith.constant 0 : i32
    %0 = arith.cmpi eq, %arg1, %c0_i32 : i32
    %1 = arith.extui %0 : i1 to i32
    %c0_i32_0 = arith.constant 0 : i32
    %2 = arith.cmpi ne, %1, %c0_i32_0 : i32
    scf.if %2 {
      %cst_9 = arith.constant 0.000000e+00 : f32
      %12 = vector.broadcast %cst_9 : f32 to vector<8x1024xf32>
      %c0_10 = arith.constant 0 : index
      %c0_11 = arith.constant 0 : index
      %13 = vector.load %arg8[%c0_10, %c0_11] : memref<8x1024xf32, #tpu.memory_space<vmem>>, vector<8x1024xf32>
      tpu.vector_store %arg8[%c0_10, %c0_11], %12 {strides = array<i32>} : memref<8x1024xf32, #tpu.memory_space<vmem>>, vector<8x1024xf32>,
    } else {
    }
    %c0 = arith.constant 0 : index
    %c0_1 = arith.constant 0 : index
    %3 = vector.load %arg8[%c0, %c0_1] : memref<8x1024xf32, #tpu.memory_space<vmem>>, vector<8x1024xf32>
    %c0_2 = arith.constant 0 : index
    %c0_3 = arith.constant 0 : index
    %4 = vector.load %arg2[%c0_2, %c0_3] : memref<8x512xf32, #tpu.memory_space<vmem>>, vector<8x512xf32>
    %c0_4 = arith.constant 0 : index
    %c0_5 = arith.constant 0 : index
    %5 = vector.load %arg3[%c0_4, %c0_5] : memref<512x1024xf32, #tpu.memory_space<vmem>>, vector<512x1024xf32>
    %cst = arith.constant dense<0.000000e+00> : vector<8x1024xf32>
    %6 = tpu.matmul %4, %5, %cst {dimension_numbers = #tpu.dot_dimension_numbers<[1], [0], [0], [1], [0, 0, 1, 1], [], []>} : vector<8x512xf32>, vector<512x1024xf32>, vector<8x1024xf32> -> vector<8x1024xf32>
    %7 = arith.addf %3, %6 : vector<8x1024xf32>
    %c0_6 = arith.constant 0 : index
    %c0_7 = arith.constant 0 : index
    %8 = vector.load %arg8[%c0_6, %c0_7] : memref<8x1024xf32, #tpu.memory_space<vmem>>, vector<8x1024xf32>
    tpu.vector_store %arg8[%c0_6, %c0_7], %7 {strides = array<i32>} : memref<8x1024xf32, #tpu.memory_space<vmem>>, vector<8x1024xf32>,
    %c1_i32 = arith.constant 1 : i32
    %9 = arith.cmpi eq, %arg1, %c1_i32 : i32
    %10 = arith.extui %9 : i1 to i32
    %c0_i32_8 = arith.constant 0 : i32
    %11 = arith.cmpi ne, %10, %c0_i32_8 : i32
    scf.if %11 {
      %c0_9 = arith.constant 0 : index
      %c0_10 = arith.constant 0 : index
      %12 = vector.load %arg8[%c0_9, %c0_10] : memref<8x1024xf32, #tpu.memory_space<vmem>>, vector<8x1024xf32>
      %c0_11 = arith.constant 0 : index
      %c0_12 = arith.constant 0 : index
      %13 = vector.load %arg4[%c0_11, %c0_12] : memref<1x1024xf32, #tpu.memory_space<vmem>>, vector<1x1024xf32>
      %14 = vector.broadcast %13 : vector<1x1024xf32> to vector<8x1024xf32>
      %15 = arith.addf %12, %14 : vector<8x1024xf32>
      %cst_13 = arith.constant 0.000000e+00 : f32
      %16 = vector.broadcast %cst_13 : f32 to vector<8x1024xf32>
      %17 = arith.maximumf %15, %16 : vector<8x1024xf32>
      %c0_14 = arith.constant 0 : index
      %c0_15 = arith.constant 0 : index
      %18 = vector.load %arg5[%c0_14, %c0_15] : memref<1024x128xf32, #tpu.memory_space<vmem>>, vector<1024x128xf32>
      %cst_16 = arith.constant dense<0.000000e+00> : vector<8x128xf32>
      %19 = tpu.matmul %17, %18, %cst_16 {dimension_numbers = #tpu.dot_dimension_numbers<[1], [0], [0], [1], [0, 0, 1, 1], [], []>} : vector<8x1024xf32>, vector<1024x128xf32>, vector<8x128xf32> -> vector<8x128xf32>
      %c0_17 = arith.constant 0 : index
      %c0_18 = arith.constant 0 : index
      %20 = vector.load %arg6[%c0_17, %c0_18] : memref<1x128xf32, #tpu.memory_space<vmem>>, vector<1x128xf32>
      %21 = vector.broadcast %20 : vector<1x128xf32> to vector<8x128xf32>
      %22 = arith.addf %19, %21 : vector<8x128xf32>
      %c0_19 = arith.constant 0 : index
      %c0_20 = arith.constant 0 : index
      %23 = vector.load %arg7[%c0_19, %c0_20] : memref<8x128xf32, #tpu.memory_space<vmem>>, vector<8x128xf32>
      tpu.vector_store %arg7[%c0_19, %c0_20], %22 {strides = array<i32>} : memref<8x128xf32, #tpu.memory_space<vmem>>, vector<8x128xf32>,
    } else {
    }
    return
  }
  func.func @transform_0(%arg0: i32, %arg1: i32) -> (i32, i32) {
    %c0_i32 = arith.constant 0 : i32
    return %arg0, %arg1 : i32, i32
  }
  func.func @transform_1(%arg0: i32, %arg1: i32) -> (i32, i32) {
    %c0_i32 = arith.constant 0 : i32
    %c0_i32_0 = arith.constant 0 : i32
    return %arg1, %c0_i32 : i32, i32
  }
  func.func @transform_2(%arg0: i32, %arg1: i32) -> (i32, i32) {
    %c0_i32 = arith.constant 0 : i32
    %c0_i32_0 = arith.constant 0 : i32
    %c0_i32_1 = arith.constant 0 : i32
    return %c0_i32, %c0_i32_0 : i32, i32
  }
  func.func @transform_3(%arg0: i32, %arg1: i32) -> (i32, i32) {
    %c0_i32 = arith.constant 0 : i32
    %c0_i32_0 = arith.constant 0 : i32
    %c0_i32_1 = arith.constant 0 : i32
    return %c0_i32, %c0_i32_0 : i32, i32
  }
  func.func @transform_4(%arg0: i32, %arg1: i32) -> (i32, i32) {
    %c0_i32 = arith.constant 0 : i32
    %c0_i32_0 = arith.constant 0 : i32
    %c0_i32_1 = arith.constant 0 : i32
    return %c0_i32, %c0_i32_0 : i32, i32
  }
  func.func @transform_5(%arg0: i32, %arg1: i32) -> (i32, i32) {
    %c0_i32 = arith.constant 0 : i32
    %c0_i32_0 = arith.constant 0 : i32
    return %arg0, %c0_i32 : i32, i32
  }
}

</mosaic_0001>

<llo_original>
// kernel: tpu_custom_call.1
$region0: #{tpu_custom_call.1}
  #allocation0 [shape = 'u32[]', space=smem, size = 0x4, offset = 0x4, fixed_abs, tag = 'smem constant byte address 0x4 - core index']
  #allocation1 [shape = 'u32[144,128]{1,0:T(1,128)}', space=vmem, size = 0x12000, scoped, tag = 'internal scratch']
  #allocation2 [shape = 'f32[8,1024]{1,0:T(8,128)}', space=vmem, size = 0x8000, scoped, tag = 'scratch operand']
  %s0 = inlined_call_operand.hbm [shape: f32[8,1024], index: 0, kind: input, shape index: {}]
  %s1 = inlined_call_operand.hbm [shape: f32[1024,1024], index: 1, kind: input, shape index: {}]
  %s2 = inlined_call_operand.hbm [shape: f32[1,1024], index: 2, kind: input, shape index: {}]
  %s3 = inlined_call_operand.hbm [shape: f32[1024,128], index: 3, kind: input, shape index: {}]
  %s4 = inlined_call_operand.hbm [shape: f32[1,128], index: 4, kind: input, shape index: {}]
  %s5 = inlined_call_operand.hbm [shape: f32[8,128], index: 5, kind: output, shape index: {}]
  %s6 = sld [smem:[#allocation0]]
  $region81: #{tpu_custom_call.1} parent=0
    _
  %s8 = ssub.s32 1, %s6
  %s9 = scalar_select 0, %s8, %s6
  $region1: #{tpu_custom_call.1} parent=0
    #allocation3 [shape = 'u8[32768]{0}', space=vmem, size = 0x8000, scoped, tag = 'input window, operand 0']
    #allocation4 [shape = 's32[2]{0}', space=sflag, size = 0x8, scoped, tag = 'scoped memory for tpu_custom_call.1']
    #allocation5 [shape = 's32[2]{0}', space=sflag, size = 0x8, scoped, tag = 'scoped memory for tpu_custom_call.1']
    #allocation6 [shape = 'u8[4194304]{0}', space=vmem, size = 0x400000, scoped, tag = 'input window, operand 1']
    #allocation7 [shape = 's32[2]{0}', space=sflag, size = 0x8, scoped, tag = 'scoped memory for tpu_custom_call.1']
    #allocation8 [shape = 'u8[4096]{0}', space=vmem, size = 0x1000, scoped, tag = 'input window, operand 2, single buffered']
    #allocation9 [shape = 'u8[524288]{0}', space=vmem, size = 0x80000, scoped, tag = 'input window, operand 3, single buffered']
    #allocation10 [shape = 's32[1]{0}', space=sflag, size = 0x4, scoped, tag = 'scoped memory for tpu_custom_call.1']
    #allocation11 [shape = 'u8[512]{0}', space=vmem, size = 0x400, scoped, tag = 'input window, operand 4, single buffered']
    #allocation12 [shape = 'u8[4096]{0}', space=vmem, size = 0x1000, scoped, tag = 'output window, operand 0, single buffered']
    %10 = vsyncpa [#allocation4], 0
    %s11 = scalar_lea.sflag [#allocation4], 1
    %12 = vsyncpa %s11, 0
    %13 = vsyncpa [#allocation7], 0
    %s14 = scalar_lea.sflag [#allocation7], 1
    %15 = vsyncpa %s14, 0
    %16 = vsyncpa [#allocation10], 0
    %17 = vsyncpa [#allocation5], 0
    loop: start=0, step=1, limit=4
    $region2: #{tpu_custom_call.1} parent=1 // loop_pre_header
      _
    $region3: #{tpu_custom_call.1} parent=1 // loop_header
      %s19 = sphi 0, %s23
      %p20 = scmp.ge.s32.totalorder %s19, 4
      %s26 = sphi 0, %s38
      %s27 = sphi 0, %s34
      %s28 = sphi 0, %s26
      %s29 = sphi 0, %s27
      %s30 = sphi 0, %s28
      %s31 = sphi 0, %s29
      %s43 = sphi 0, %s45
      %s46 = sphi 0, %s43
      %s47 = sphi 0, %s46
      %s63 = sphi 0, %s47
      %s69 = sphi 0, %s71
      %s72 = sphi 0, %s69
      %s73 = sphi 0, %s72
      %s89 = sphi 0, %s73
      %s93 = sphi 0, %s93
      %s95 = sphi 0, %s93
      %s96 = sphi 0, %s95
      %s110 = sphi 0, %s96
      %s114 = sphi 0, %s114
      %s116 = sphi 0, %s114
      %s117 = sphi 0, %s116
      %s131 = sphi 0, %s117
      %s135 = sphi 0, %s135
      %s137 = sphi 0, %s135
      %s138 = sphi 0, %s137
      %s152 = sphi 0, %s138
      %s158 = sphi 0, %s160
      %s161 = sphi 0, %s158
      %s162 = sphi 0, %s161
      %s178 = sphi 0, %s162
    $region4: #{tpu_custom_call.1} parent=1 // loop_header_branch
      %22 = sbr.rel (%p20) target = $region8
    $region5: #{tpu_custom_call.1} parent=1 // loop_body
      %s24 = ssub.s32 %s19, 1
      %s25 = ssub.s32 %s19, 2
      %s32 = sadd.s32 1, %s27
      %p33 = scmp.ge.s32.totalorder %s32, 2
      %s34 = scalar_select %p33, 0, %s32
      %s35 = sadd.s32 1, %s26
      %s36 = scalar_select %p33, %s35, %s26
      %p37 = scmp.ge.s32.totalorder %s36, 1
      %s38 = scalar_select %p37, 0, %s36
      %s39 = ssub.s32 %s26, %s38
      %s40 = ssub.s32 %s27, %s34
      %s41 = sor.u32 %s39, %s40
      %p42 = scmp.eq.s32.totalorder %s41, 0
      %s44 = sadd.s32 %s43, 1
      %s45 = scalar_select %p42, %s43, %s44
      %p48 = pneg %p42
      %p49 = scmp.eq.s32.totalorder %s19, 1
      %p50 = por %p48, %p49
      %p51 = scmp.ne.s32.totalorder %s43, %s46
      %p52 = scmp.eq.s32.totalorder %s19, 0
      %p53 = por %p51, %p52
      %p54 = scmp.ne.s32.totalorder %s43, %s46
      %p55 = scmp.eq.s32.totalorder %s24, 1
      %p56 = por %p54, %p55
      %p57 = scmp.ne.s32.totalorder %s46, %s47
      %p58 = scmp.eq.s32.totalorder %s24, 0
      %p59 = por %p57, %p58
      %p60 = scmp.ne.s32.totalorder %s46, %s47
      %p61 = scmp.eq.s32.totalorder %s25, 1
      %p62 = por %p60, %p61
      %p64 = scmp.ne.s32.totalorder %s47, %s63
      %p65 = scmp.eq.s32.totalorder %s25, 0
      %p66 = por %p64, %p65
      %s67 = ssub.s32 %s27, %s34
      %p68 = scmp.eq.s32.totalorder %s67, 0
      %s70 = sadd.s32 %s69, 1
      %s71 = scalar_select %p68, %s69, %s70
      %p74 = pneg %p68
      %p75 = scmp.eq.s32.totalorder %s19, 1
      %p76 = por %p74, %p75
      %p77 = scmp.ne.s32.totalorder %s69, %s72
      %p78 = scmp.eq.s32.totalorder %s19, 0
      %p79 = por %p77, %p78
      %p80 = scmp.ne.s32.totalorder %s69, %s72
      %p81 = scmp.eq.s32.totalorder %s24, 1
      %p82 = por %p80, %p81
      %p83 = scmp.ne.s32.totalorder %s72, %s73
      %p84 = scmp.eq.s32.totalorder %s24, 0
      %p85 = por %p83, %p84
      %p86 = scmp.ne.s32.totalorder %s72, %s73
      %p87 = scmp.eq.s32.totalorder %s25, 1
      %p88 = por %p86, %p87
      %p90 = scmp.ne.s32.totalorder %s73, %s89
      %p91 = scmp.eq.s32.totalorder %s25, 0
      %p92 = por %p90, %p91
      %s94 = sadd.s32 %s93, 1
      %p97 = scmp.eq.s32.totalorder %s19, 1
      %p98 = scmp.ne.s32.totalorder %s93, %s95
      %p99 = scmp.eq.s32.totalorder %s19, 0
      %p100 = por %p98, %p99
      %p101 = scmp.ne.s32.totalorder %s93, %s95
      %p102 = scmp.eq.s32.totalorder %s24, 1
      %p103 = por %p101, %p102
      %p104 = scmp.ne.s32.totalorder %s95, %s96
      %p105 = scmp.eq.s32.totalorder %s24, 0
      %p106 = por %p104, %p105
      %p107 = scmp.ne.s32.totalorder %s95, %s96
      %p108 = scmp.eq.s32.totalorder %s25, 1
      %p109 = por %p107, %p108
      %p111 = scmp.ne.s32.totalorder %s96, %s110
      %p112 = scmp.eq.s32.totalorder %s25, 0
      %p113 = por %p111, %p112
      %s115 = sadd.s32 %s114, 1
      %p118 = scmp.eq.s32.totalorder %s19, 1
      %p119 = scmp.ne.s32.totalorder %s114, %s116
      %p120 = scmp.eq.s32.totalorder %s19, 0
      %p121 = por %p119, %p120
      %p122 = scmp.ne.s32.totalorder %s114, %s116
      %p123 = scmp.eq.s32.totalorder %s24, 1
      %p124 = por %p122, %p123
      %p125 = scmp.ne.s32.totalorder %s116, %s117
      %p126 = scmp.eq.s32.totalorder %s24, 0
      %p127 = por %p125, %p126
      %p128 = scmp.ne.s32.totalorder %s116, %s117
      %p129 = scmp.eq.s32.totalorder %s25, 1
      %p130 = por %p128, %p129
      %p132 = scmp.ne.s32.totalorder %s117, %s131
      %p133 = scmp.eq.s32.totalorder %s25, 0
      %p134 = por %p132, %p133
      %s136 = sadd.s32 %s135, 1
      %p139 = scmp.eq.s32.totalorder %s19, 1
      %p140 = scmp.ne.s32.totalorder %s135, %s137
      %p141 = scmp.eq.s32.totalorder %s19, 0
      %p142 = por %p140, %p141
      %p143 = scmp.ne.s32.totalorder %s135, %s137
      %p144 = scmp.eq.s32.totalorder %s24, 1
      %p145 = por %p143, %p144
      %p146 = scmp.ne.s32.totalorder %s137, %s138
      %p147 = scmp.eq.s32.totalorder %s24, 0
      %p148 = por %p146, %p147
      %p149 = scmp.ne.s32.totalorder %s137, %s138
      %p150 = scmp.eq.s32.totalorder %s25, 1
      %p151 = por %p149, %p150
      %p153 = scmp.ne.s32.totalorder %s138, %s152
      %p154 = scmp.eq.s32.totalorder %s25, 0
      %p155 = por %p153, %p154
      %s156 = ssub.s32 %s26, %s38
      %p157 = scmp.eq.s32.totalorder %s156, 0
      %s159 = sadd.s32 %s158, 1
      %s160 = scalar_select %p157, %s158, %s159
      %p163 = pneg %p157
      %p164 = scmp.eq.s32.totalorder %s19, 1
      %p165 = por %p163, %p164
      %p166 = scmp.ne.s32.totalorder %s158, %s161
      %p167 = scmp.eq.s32.totalorder %s19, 0
      %p168 = por %p166, %p167
      %p169 = scmp.ne.s32.totalorder %s158, %s161
      %p170 = scmp.eq.s32.totalorder %s24, 1
      %p171 = por %p169, %p170
      %p172 = scmp.ne.s32.totalorder %s161, %s162
      %p173 = scmp.eq.s32.totalorder %s24, 0
      %p174 = por %p172, %p173
      %p175 = scmp.ne.s32.totalorder %s161, %s162
      %p176 = scmp.eq.s32.totalorder %s25, 1
      %p177 = por %p175, %p176
      %p179 = scmp.ne.s32.totalorder %s162, %s178
      %p180 = scmp.eq.s32.totalorder %s25, 0
      %p181 = por %p179, %p180
      %p182 = scmp.le.s32.totalorder 1, %s19
      %p183 = scmp.lt.s32.totalorder %s19, 3
      %p184 = pnand %p182, %p183
      %p185 = pneg %p184
      // Predicated region
      $region9: #{tpu_custom_call.1} parent=5 // pred_check
        _
      $region10: #{tpu_custom_call.1} parent=5 // pred_check_branch
        %187 = sbr.rel (%p184) target = $region12
      $region11: #{tpu_custom_call.1} parent=5 // pred_region
        %s188 = ssub.s32 %s19, 1
        // Predicated region
        $region13: #{tpu_custom_call.1} parent=11 // pred_check
          %p189 = pneg %p106
        $region14: #{tpu_custom_call.1} parent=11 // pred_check_branch
          %191 = sbr.rel (%p189) target = $region16
        $region15: #{tpu_custom_call.1} parent=11 // pred_region
          %s193 = ssub.s32 128, 128
          %194 = vsyncadd [#allocation7], %s193
          %s196 = sshll.u32 [#allocation8], 4
          %s197 = int_to_ptr.vmem [resolvable:$true] %s196
          %199 = dma.hbm_to_vmem [thread:$0]  %s2, 128, %s197, [#allocation7]
        $region16: #{tpu_custom_call.1} parent=11 // pred_fallthru
          _
        // Predicated region
        $region17: #{tpu_custom_call.1} parent=11 // pred_check
          %p200 = pneg %p127
        $region18: #{tpu_custom_call.1} parent=11 // pred_check_branch
          %202 = sbr.rel (%p200) target = $region20
        $region19: #{tpu_custom_call.1} parent=11 // pred_region
          %s204 = ssub.s32 16384, 16384
          %205 = vsyncadd [#allocation10], %s204
          %s206 = sshll.u32 [#allocation9], 4
          %s207 = int_to_ptr.vmem [resolvable:$true] %s206
          %212 = dma.hbm_to_vmem [thread:$0]  %s3, 16384, %s207, [#allocation10], 128, 128, 8
        $region20: #{tpu_custom_call.1} parent=11 // pred_fallthru
          _
        // Predicated region
        $region21: #{tpu_custom_call.1} parent=11 // pred_check
          %p213 = pneg %p148
        $region22: #{tpu_custom_call.1} parent=11 // pred_check_branch
          %215 = sbr.rel (%p213) target = $region24
        $region23: #{tpu_custom_call.1} parent=11 // pred_region
          %s217 = ssub.s32 16, 16
          %218 = vsyncadd [#allocation10], %s217
          %s220 = sshll.u32 [#allocation11], 4
          %s221 = int_to_ptr.vmem [resolvable:$true] %s220
          %223 = dma.hbm_to_vmem [thread:$0]  %s4, 16, %s221, [#allocation10]
        $region24: #{tpu_custom_call.1} parent=11 // pred_fallthru
          _
      $region12: #{tpu_custom_call.1} parent=5 // pred_fallthru
        _
      %p224 = scmp.lt.s32.totalorder %s19, 2
      // Predicated region
      $region25: #{tpu_custom_call.1} parent=5 // pred_check
        %p225 = pneg %p224
      $region26: #{tpu_custom_call.1} parent=5 // pred_check_branch
        %227 = sbr.rel (%p225) target = $region28
      $region27: #{tpu_custom_call.1} parent=5 // pred_region
        // Predicated region
        $region29: #{tpu_custom_call.1} parent=27 // pred_check
          %p228 = pneg %p53
        $region30: #{tpu_custom_call.1} parent=27 // pred_check_branch
          %230 = sbr.rel (%p228) target = $region32
        $region31: #{tpu_custom_call.1} parent=27 // pred_region
          %s231 = sand.u32 %s43, 1
          %s232 = scalar_lea.sflag [#allocation4], %s231
          %s233 = sand.u32 %s43, 1
          %s234 = smul.addr %s233, 32
          %s235 = scalar_lea.vmem [#allocation3], %s234
          %s236 = smul.u32 4, %s27
          %s238 = ssub.s32 512, 512
          %239 = vsyncadd %s232, %s238
          %s240 = smul.addr %s26, 8
          %s241 = sadd.s32 %s236, %s240
          %s242 = smul.addr %s241, 128
          %s243 = scalar_lea.hbm %s0, %s242
          %s245 = sshll.u32 %s235, 4
          %s246 = int_to_ptr.vmem [resolvable:$true] %s245
          %248 = dma.hbm_to_vmem [thread:$0]  %s243, 512, %s246, %s232
        $region32: #{tpu_custom_call.1} parent=27 // pred_fallthru
          _
        // Predicated region
        $region33: #{tpu_custom_call.1} parent=27 // pred_check
          %p249 = pneg %p79
        $region34: #{tpu_custom_call.1} parent=27 // pred_check_branch
          %251 = sbr.rel (%p249) target = $region36
        $region35: #{tpu_custom_call.1} parent=27 // pred_region
          %s252 = sand.u32 %s19, 1
          %s253 = scalar_lea.sflag [#allocation7], %s252
          %s254 = sand.u32 %s69, 1
          %s255 = smul.addr %s254, 4096
          %s256 = scalar_lea.vmem [#allocation6], %s255
          %s257 = smul.u32 64, %s27
          %s259 = ssub.s32 65536, 65536
          %260 = vsyncadd %s253, %s259
          %s261 = smul.addr %s257, 8
          %s262 = smul.addr %s261, 128
          %s263 = scalar_lea.hbm %s1, %s262
          %s264 = sshll.u32 %s256, 4
          %s265 = int_to_ptr.vmem [resolvable:$true] %s264
          %270 = dma.hbm_to_vmem [thread:$0]  %s263, 65536, %s265, %s253, 1024, 1024, 64
        $region36: #{tpu_custom_call.1} parent=27 // pred_fallthru
          _
      $region28: #{tpu_custom_call.1} parent=5 // pred_fallthru
        _
      %p271 = scmp.le.s32.totalorder 1, %s19
      %p272 = scmp.lt.s32.totalorder %s19, 3
      %p273 = pnand %p271, %p272
      %p274 = pneg %p273
      // Predicated region
      $region37: #{tpu_custom_call.1} parent=5 // pred_check
        _
      $region38: #{tpu_custom_call.1} parent=5 // pred_check_branch
        %276 = sbr.rel (%p273) target = $region40
      $region39: #{tpu_custom_call.1} parent=5 // pred_region
        %s277 = ssub.s32 %s19, 1
        %s278 = sand.u32 %s46, 1
        %s279 = scalar_lea.sflag [#allocation4], %s278
        %s280 = sand.u32 %s46, 1
        %s281 = smul.addr %s280, 32
        %s282 = scalar_lea.vmem [#allocation3], %s281
        // Predicated region
        $region41: #{tpu_custom_call.1} parent=39 // pred_check
          %p283 = pneg %p59
        $region42: #{tpu_custom_call.1} parent=39 // pred_check_branch
          %285 = sbr.rel (%p283) target = $region44
        $region43: #{tpu_custom_call.1} parent=39 // pred_region
          %286 = dma.done %s279, 512
        $region44: #{tpu_custom_call.1} parent=39 // pred_fallthru
          _
        %s287 = sand.u32 %s24, 1
        %s288 = scalar_lea.sflag [#allocation7], %s287
        %s289 = sand.u32 %s72, 1
        %s290 = smul.addr %s289, 4096
        %s291 = scalar_lea.vmem [#allocation6], %s290
        // Predicated region
        $region45: #{tpu_custom_call.1} parent=39 // pred_check
          %p292 = pneg %p85
        $region46: #{tpu_custom_call.1} parent=39 // pred_check_branch
          %294 = sbr.rel (%p292) target = $region48
        $region47: #{tpu_custom_call.1} parent=39 // pred_region
          %295 = dma.done %s288, 65536
        $region48: #{tpu_custom_call.1} parent=39 // pred_fallthru
          _
        // Predicated region
        $region49: #{tpu_custom_call.1} parent=39 // pred_check
          %p296 = pneg %p106
        $region50: #{tpu_custom_call.1} parent=39 // pred_check_branch
          %298 = sbr.rel (%p296) target = $region52
        $region51: #{tpu_custom_call.1} parent=39 // pred_region
          %299 = dma.done [#allocation7], 128
        $region52: #{tpu_custom_call.1} parent=39 // pred_fallthru
          _
        // Predicated region
        $region53: #{tpu_custom_call.1} parent=39 // pred_check
          %p300 = pneg %p127
        $region54: #{tpu_custom_call.1} parent=39 // pred_check_branch
          %302 = sbr.rel (%p300) target = $region56
        $region55: #{tpu_custom_call.1} parent=39 // pred_region
          %303 = dma.done [#allocation10], 16384
        $region56: #{tpu_custom_call.1} parent=39 // pred_fallthru
          _
        // Predicated region
        $region57: #{tpu_custom_call.1} parent=39 // pred_check
          %p304 = pneg %p148
        $region58: #{tpu_custom_call.1} parent=39 // pred_check_branch
          %306 = sbr.rel (%p304) target = $region60
        $region59: #{tpu_custom_call.1} parent=39 // pred_region
          %307 = dma.done [#allocation10], 16
        $region60: #{tpu_custom_call.1} parent=39 // pred_fallthru
          _
        %s308 = sand.u32 %s46, 1
        %s309 = scalar_lea.sflag [#allocation4], %s308
        %s310 = sand.u32 %s46, 1
        %s311 = smul.addr %s310, 32
        %s312 = scalar_lea.vmem [#allocation3], %s311
        %p313 = pneg %p59
        %p314 = pneg %p56
        %s315 = sand.u32 %s24, 1
        %s316 = scalar_lea.sflag [#allocation7], %s315
        %s317 = sand.u32 %s72, 1
        %s318 = smul.addr %s317, 4096
        %s319 = scalar_lea.vmem [#allocation6], %s318
        %p320 = pneg %p85
        %p321 = pneg %p82
        %p322 = pneg %p106
        %p323 = pneg %p103
        %p324 = pneg %p127
        %p325 = pneg %p124
        %p326 = pneg %p148
        %p327 = pneg %p145
        %p328 = pneg %p174
        %p329 = pneg %p171
        %s330 = smul.u32 4, %s29
        %s331 = smul.u32 64, %s29
        %p332 = scmp.eq.s32.totalorder %s29, 0
        // Predicated region
        $region61: #{tpu_custom_call.1} parent=39 // pred_check
          %p333 = pneg %p332
        $region62: #{tpu_custom_call.1} parent=39 // pred_check_branch
          %335 = sbr.rel (%p333) target = $region64
        $region63: #{tpu_custom_call.1} parent=39 // pred_region
          %336 = vst [vmem:[#allocation2] sm:$0xff] 0.0
          %337 = vst [vmem:[#allocation2 + $0x8] sm:$0xff] 0.0
          %338 = vst [vmem:[#allocation2 + $0x10] sm:$0xff] 0.0
          %339 = vst [vmem:[#allocation2 + $0x18] sm:$0xff] 0.0
          %340 = vst [vmem:[#allocation2 + $0x20] sm:$0xff] 0.0
          %341 = vst [vmem:[#allocation2 + $0x28] sm:$0xff] 0.0
          %342 = vst [vmem:[#allocation2 + $0x30] sm:$0xff] 0.0
          %343 = vst [vmem:[#allocation2 + $0x38] sm:$0xff] 0.0
        $region64: #{tpu_custom_call.1} parent=39 // pred_fallthru
          _
        %v344 = vld [vmem:[#allocation2] sm:$0xff]
        %v345 = vld [vmem:[#allocation2 + $0x8] sm:$0xff]
        %v346 = vld [vmem:[#allocation2 + $0x10] sm:$0xff]
        %v347 = vld [vmem:[#allocation2 + $0x18] sm:$0xff]
        %v348 = vld [vmem:[#allocation2 + $0x20] sm:$0xff]
        %v349 = vld [vmem:[#allocation2 + $0x28] sm:$0xff]
        %v350 = vld [vmem:[#allocation2 + $0x30] sm:$0xff]
        %v351 = vld [vmem:[#allocation2 + $0x38] sm:$0xff]
        %v352 = vld [vmem:[%s282] sm:$0xff]
        %v353 = vld [vmem:[%s282 + $0x8] sm:$0xff]
        %v354 = vld [vmem:[%s282 + $0x10] sm:$0xff]
        %v355 = vld [vmem:[%s282 + $0x18] sm:$0xff]
        %v356 = vld [vmem:[%s291] sm:$0xff]
        %v357 = vld [vmem:[%s291 + $0x8] sm:$0xff]
        %v358 = vld [vmem:[%s291 + $0x10] sm:$0xff]
        %v359 = vld [vmem:[%s291 + $0x18] sm:$0xff]
        %v360 = vld [vmem:[%s291 + $0x20] sm:$0xff]
        %v361 = vld [vmem:[%s291 + $0x28] sm:$0xff]
        %v362 = vld [vmem:[%s291 + $0x30] sm:$0xff]
        %v363 = vld [vmem:[%s291 + $0x38] sm:$0xff]
        %v364 = vld [vmem:[%s291 + $0x40] sm:$0xff]
        %v365 = vld [vmem:[%s291 + $0x48] sm:$0xff]
        %v366 = vld [vmem:[%s291 + $0x50] sm:$0xff]
        %v367 = vld [vmem:[%s291 + $0x58] sm:$0xff]
        %v368 = vld [vmem:[%s291 + $0x60] sm:$0xff]
        %v369 = vld [vmem:[%s291 + $0x68] sm:$0xff]
        %v370 = vld [vmem:[%s291 + $0x70] sm:$0xff]
        %v371 = vld [vmem:[%s291 + $0x78] sm:$0xff]
        %v372 = vld [vmem:[%s291 + $0x80] sm:$0xff]
        %v373 = vld [vmem:[%s291 + $0x88] sm:$0xff]
        %v374 = vld [vmem:[%s291 + $0x90] sm:$0xff]
        %v375 = vld [vmem:[%s291 + $0x98] sm:$0xff]
        %v376 = vld [vmem:[%s291 + $0xa0] sm:$0xff]
        %v377 = vld [vmem:[%s291 + $0xa8] sm:$0xff]
        %v378 = vld [vmem:[%s291 + $0xb0] sm:$0xff]
        %v379 = vld [vmem:[%s291 + $0xb8] sm:$0xff]
        %v380 = vld [vmem:[%s291 + $0xc0] sm:$0xff]
        %v381 = vld [vmem:[%s291 + $0xc8] sm:$0xff]
        %v382 = vld [vmem:[%s291 + $0xd0] sm:$0xff]
        %v383 = vld [vmem:[%s291 + $0xd8] sm:$0xff]
        %v384 = vld [vmem:[%s291 + $0xe0] sm:$0xff]
        %v385 = vld [vmem:[%s291 + $0xe8] sm:$0xff]
        %v386 = vld [vmem:[%s291 + $0xf0] sm:$0xff]
        %v387 = vld [vmem:[%s291 + $0xf8] sm:$0xff]
        %v388 = vld [vmem:[%s291 + $0x100] sm:$0xff]
        %v389 = vld [vmem:[%s291 + $0x108] sm:$0xff]
        %v390 = vld [vmem:[%s291 + $0x110] sm:$0xff]
        %v391 = vld [vmem:[%s291 + $0x118] sm:$0xff]
        %v392 = vld [vmem:[%s291 + $0x120] sm:$0xff]
        %v393 = vld [vmem:[%s291 + $0x128] sm:$0xff]
        %v394 = vld [vmem:[%s291 + $0x130] sm:$0xff]
        %v395 = vld [vmem:[%s291 + $0x138] sm:$0xff]
        %v396 = vld [vmem:[%s291 + $0x140] sm:$0xff]
        %v397 = vld [vmem:[%s291 + $0x148] sm:$0xff]
        %v398 = vld [vmem:[%s291 + $0x150] sm:$0xff]
        %v399 = vld [vmem:[%s291 + $0x158] sm:$0xff]
        %v400 = vld [vmem:[%s291 + $0x160] sm:$0xff]
        %v401 = vld [vmem:[%s291 + $0x168] sm:$0xff]
        %v402 = vld [vmem:[%s291 + $0x170] sm:$0xff]
        %v403 = vld [vmem:[%s291 + $0x178] sm:$0xff]
        %v404 = vld [vmem:[%s291 + $0x180] sm:$0xff]
        %v405 = vld [vmem:[%s291 + $0x188] sm:$0xff]
        %v406 = vld [vmem:[%s291 + $0x190] sm:$0xff]
        %v407 = vld [vmem:[%s291 + $0x198] sm:$0xff]
        %v408 = vld [vmem:[%s291 + $0x1a0] sm:$0xff]
        %v409 = vld [vmem:[%s291 + $0x1a8] sm:$0xff]
        %v410 = vld [vmem:[%s291 + $0x1b0] sm:$0xff]
        %v411 = vld [vmem:[%s291 + $0x1b8] sm:$0xff]
        %v412 = vld [vmem:[%s291 + $0x1c0] sm:$0xff]
        %v413 = vld [vmem:[%s291 + $0x1c8] sm:$0xff]
        %v414 = vld [vmem:[%s291 + $0x1d0] sm:$0xff]
        %v415 = vld [vmem:[%s291 + $0x1d8] sm:$0xff]
        %v416 = vld [vmem:[%s291 + $0x1e0] sm:$0xff]
        %v417 = vld [vmem:[%s291 + $0x1e8] sm:$0xff]
        %v418 = vld [vmem:[%s291 + $0x1f0] sm:$0xff]
        %v419 = vld [vmem:[%s291 + $0x1f8] sm:$0xff]
        %v420 = vld [vmem:[%s291 + $0x200] sm:$0xff]
        %v421 = vld [vmem:[%s291 + $0x208] sm:$0xff]
        %v422 = vld [vmem:[%s291 + $0x210] sm:$0xff]
        %v423 = vld [vmem:[%s291 + $0x218] sm:$0xff]
        %v424 = vld [vmem:[%s291 + $0x220] sm:$0xff]
        %v425 = vld [vmem:[%s291 + $0x228] sm:$0xff]
        %v426 = vld [vmem:[%s291 + $0x230] sm:$0xff]
        %v427 = vld [vmem:[%s291 + $0x238] sm:$0xff]
        %v428 = vld [vmem:[%s291 + $0x240] sm:$0xff]
        %v429 = vld [vmem:[%s291 + $0x248] sm:$0xff]
        %v430 = vld [vmem:[%s291 + $0x250] sm:$0xff]
        %v431 = vld [vmem:[%s291 + $0x258] sm:$0xff]
        %v432 = vld [vmem:[%s291 + $0x260] sm:$0xff]
        %v433 = vld [vmem:[%s291 + $0x268] sm:$0xff]
        %v434 = vld [vmem:[%s291 + $0x270] sm:$0xff]
        %v435 = vld [vmem:[%s291 + $0x278] sm:$0xff]
        %v436 = vld [vmem:[%s291 + $0x280] sm:$0xff]
        %v437 = vld [vmem:[%s291 + $0x288] sm:$0xff]
        %v438 = vld [vmem:[%s291 + $0x290] sm:$0xff]
        %v439 = vld [vmem:[%s291 + $0x298] sm:$0xff]
        %v440 = vld [vmem:[%s291 + $0x2a0] sm:$0xff]
        %v441 = vld [vmem:[%s291 + $0x2a8] sm:$0xff]
        %v442 = vld [vmem:[%s291 + $0x2b0] sm:$0xff]
        %v443 = vld [vmem:[%s291 + $0x2b8] sm:$0xff]
        %v444 = vld [vmem:[%s291 + $0x2c0] sm:$0xff]
        %v445 = vld [vmem:[%s291 + $0x2c8] sm:$0xff]
        %v446 = vld [vmem:[%s291 + $0x2d0] sm:$0xff]
        %v447 = vld [vmem:[%s291 + $0x2d8] sm:$0xff]
        %v448 = vld [vmem:[%s291 + $0x2e0] sm:$0xff]
        %v449 = vld [vmem:[%s291 + $0x2e8] sm:$0xff]
        %v450 = vld [vmem:[%s291 + $0x2f0] sm:$0xff]
        %v451 = vld [vmem:[%s291 + $0x2f8] sm:$0xff]
        %v452 = vld [vmem:[%s291 + $0x300] sm:$0xff]
        %v453 = vld [vmem:[%s291 + $0x308] sm:$0xff]
        %v454 = vld [vmem:[%s291 + $0x310] sm:$0xff]
        %v455 = vld [vmem:[%s291 + $0x318] sm:$0xff]
        %v456 = vld [vmem:[%s291 + $0x320] sm:$0xff]
        %v457 = vld [vmem:[%s291 + $0x328] sm:$0xff]
        %v458 = vld [vmem:[%s291 + $0x330] sm:$0xff]
        %v459 = vld [vmem:[%s291 + $0x338] sm:$0xff]
        %v460 = vld [vmem:[%s291 + $0x340] sm:$0xff]
        %v461 = vld [vmem:[%s291 + $0x348] sm:$0xff]
        %v462 = vld [vmem:[%s291 + $0x350] sm:$0xff]
        %v463 = vld [vmem:[%s291 + $0x358] sm:$0xff]
        %v464 = vld [vmem:[%s291 + $0x360] sm:$0xff]
        %v465 = vld [vmem:[%s291 + $0x368] sm:$0xff]
        %v466 = vld [vmem:[%s291 + $0x370] sm:$0xff]
        %v467 = vld [vmem:[%s291 + $0x378] sm:$0xff]
        %v468 = vld [vmem:[%s291 + $0x380] sm:$0xff]
        %v469 = vld [vmem:[%s291 + $0x388] sm:$0xff]
        %v470 = vld [vmem:[%s291 + $0x390] sm:$0xff]
        %v471 = vld [vmem:[%s291 + $0x398] sm:$0xff]
        %v472 = vld [vmem:[%s291 + $0x3a0] sm:$0xff]
        %v473 = vld [vmem:[%s291 + $0x3a8] sm:$0xff]
        %v474 = vld [vmem:[%s291 + $0x3b0] sm:$0xff]
        %v475 = vld [vmem:[%s291 + $0x3b8] sm:$0xff]
        %v476 = vld [vmem:[%s291 + $0x3c0] sm:$0xff]
        %v477 = vld [vmem:[%s291 + $0x3c8] sm:$0xff]
        %v478 = vld [vmem:[%s291 + $0x3d0] sm:$0xff]
        %v479 = vld [vmem:[%s291 + $0x3d8] sm:$0xff]
        %v480 = vld [vmem:[%s291 + $0x3e0] sm:$0xff]
        %v481 = vld [vmem:[%s291 + $0x3e8] sm:$0xff]
        %v482 = vld [vmem:[%s291 + $0x3f0] sm:$0xff]
        %v483 = vld [vmem:[%s291 + $0x3f8] sm:$0xff]
        %v484 = vld [vmem:[%s291 + $0x400] sm:$0xff]
        %v485 = vld [vmem:[%s291 + $0x408] sm:$0xff]
        %v486 = vld [vmem:[%s291 + $0x410] sm:$0xff]
        %v487 = vld [vmem:[%s291 + $0x418] sm:$0xff]
        %v488 = vld [vmem:[%s291 + $0x420] sm:$0xff]
        %v489 = vld [vmem:[%s291 + $0x428] sm:$0xff]
        %v490 = vld [vmem:[%s291 + $0x430] sm:$0xff]
        %v491 = vld [vmem:[%s291 + $0x438] sm:$0xff]
        %v492 = vld [vmem:[%s291 + $0x440] sm:$0xff]
        %v493 = vld [vmem:[%s291 + $0x448] sm:$0xff]
        %v494 = vld [vmem:[%s291 + $0x450] sm:$0xff]
        %v495 = vld [vmem:[%s291 + $0x458] sm:$0xff]
        %v496 = vld [vmem:[%s291 + $0x460] sm:$0xff]
        %v497 = vld [vmem:[%s291 + $0x468] sm:$0xff]
        %v498 = vld [vmem:[%s291 + $0x470] sm:$0xff]
        %v499 = vld [vmem:[%s291 + $0x478] sm:$0xff]
        %v500 = vld [vmem:[%s291 + $0x480] sm:$0xff]
        %v501 = vld [vmem:[%s291 + $0x488] sm:$0xff]
        %v502 = vld [vmem:[%s291 + $0x490] sm:$0xff]
        %v503 = vld [vmem:[%s291 + $0x498] sm:$0xff]
        %v504 = vld [vmem:[%s291 + $0x4a0] sm:$0xff]
        %v505 = vld [vmem:[%s291 + $0x4a8] sm:$0xff]
        %v506 = vld [vmem:[%s291 + $0x4b0] sm:$0xff]
        %v507 = vld [vmem:[%s291 + $0x4b8] sm:$0xff]
        %v508 = vld [vmem:[%s291 + $0x4c0] sm:$0xff]
        %v509 = vld [vmem:[%s291 + $0x4c8] sm:$0xff]
        %v510 = vld [vmem:[%s291 + $0x4d0] sm:$0xff]
        %v511 = vld [vmem:[%s291 + $0x4d8] sm:$0xff]
        %v512 = vld [vmem:[%s291 + $0x4e0] sm:$0xff]
        %v513 = vld [vmem:[%s291 + $0x4e8] sm:$0xff]
        %v514 = vld [vmem:[%s291 + $0x4f0] sm:$0xff]
        %v515 = vld [vmem:[%s291 + $0x4f8] sm:$0xff]
        %v516 = vld [vmem:[%s291 + $0x500] sm:$0xff]
        %v517 = vld [vmem:[%s291 + $0x508] sm:$0xff]
        %v518 = vld [vmem:[%s291 + $0x510] sm:$0xff]
        %v519 = vld [vmem:[%s291 + $0x518] sm:$0xff]
        %v520 = vld [vmem:[%s291 + $0x520] sm:$0xff]
        %v521 = vld [vmem:[%s291 + $0x528] sm:$0xff]
        %v522 = vld [vmem:[%s291 + $0x530] sm:$0xff]
        %v523 = vld [vmem:[%s291 + $0x538] sm:$0xff]
        %v524 = vld [vmem:[%s291 + $0x540] sm:$0xff]
        %v525 = vld [vmem:[%s291 + $0x548] sm:$0xff]
        %v526 = vld [vmem:[%s291 + $0x550] sm:$0xff]
        %v527 = vld [vmem:[%s291 + $0x558] sm:$0xff]
        %v528 = vld [vmem:[%s291 + $0x560] sm:$0xff]
        %v529 = vld [vmem:[%s291 + $0x568] sm:$0xff]
        %v530 = vld [vmem:[%s291 + $0x570] sm:$0xff]
        %v531 = vld [vmem:[%s291 + $0x578] sm:$0xff]
        %v532 = vld [vmem:[%s291 + $0x580] sm:$0xff]
        %v533 = vld [vmem:[%s291 + $0x588] sm:$0xff]
        %v534 = vld [vmem:[%s291 + $0x590] sm:$0xff]
        %v535 = vld [vmem:[%s291 + $0x598] sm:$0xff]
        %v536 = vld [vmem:[%s291 + $0x5a0] sm:$0xff]
        %v537 = vld [vmem:[%s291 + $0x5a8] sm:$0xff]
        %v538 = vld [vmem:[%s291 + $0x5b0] sm:$0xff]
        %v539 = vld [vmem:[%s291 + $0x5b8] sm:$0xff]
        %v540 = vld [vmem:[%s291 + $0x5c0] sm:$0xff]
        %v541 = vld [vmem:[%s291 + $0x5c8] sm:$0xff]
        %v542 = vld [vmem:[%s291 + $0x5d0] sm:$0xff]
        %v543 = vld [vmem:[%s291 + $0x5d8] sm:$0xff]
        %v544 = vld [vmem:[%s291 + $0x5e0] sm:$0xff]
        %v545 = vld [vmem:[%s291 + $0x5e8] sm:$0xff]
        %v546 = vld [vmem:[%s291 + $0x5f0] sm:$0xff]
        %v547 = vld [vmem:[%s291 + $0x5f8] sm:$0xff]
        %v548 = vld [vmem:[%s291 + $0x600] sm:$0xff]
        %v549 = vld [vmem:[%s291 + $0x608] sm:$0xff]
        %v550 = vld [vmem:[%s291 + $0x610] sm:$0xff]
        %v551 = vld [vmem:[%s291 + $0x618] sm:$0xff]
        %v552 = vld [vmem:[%s291 + $0x620] sm:$0xff]
        %v553 = vld [vmem:[%s291 + $0x628] sm:$0xff]
        %v554 = vld [vmem:[%s291 + $0x630] sm:$0xff]
        %v555 = vld [vmem:[%s291 + $0x638] sm:$0xff]
        %v556 = vld [vmem:[%s291 + $0x640] sm:$0xff]
        %v557 = vld [vmem:[%s291 + $0x648] sm:$0xff]
        %v558 = vld [vmem:[%s291 + $0x650] sm:$0xff]
        %v559 = vld [vmem:[%s291 + $0x658] sm:$0xff]
        %v560 = vld [vmem:[%s291 + $0x660] sm:$0xff]
        %v561 = vld [vmem:[%s291 + $0x668] sm:$0xff]
        %v562 = vld [vmem:[%s291 + $0x670] sm:$0xff]
        %v563 = vld [vmem:[%s291 + $0x678] sm:$0xff]
        %v564 = vld [vmem:[%s291 + $0x680] sm:$0xff]
        %v565 = vld [vmem:[%s291 + $0x688] sm:$0xff]
        %v566 = vld [vmem:[%s291 + $0x690] sm:$0xff]
        %v567 = vld [vmem:[%s291 + $0x698] sm:$0xff]
        %v568 = vld [vmem:[%s291 + $0x6a0] sm:$0xff]
        %v569 = vld [vmem:[%s291 + $0x6a8] sm:$0xff]
        %v570 = vld [vmem:[%s291 + $0x6b0] sm:$0xff]
        %v571 = vld [vmem:[%s291 + $0x6b8] sm:$0xff]
        %v572 = vld [vmem:[%s291 + $0x6c0] sm:$0xff]
        %v573 = vld [vmem:[%s291 + $0x6c8] sm:$0xff]
        %v574 = vld [vmem:[%s291 + $0x6d0] sm:$0xff]
        %v575 = vld [vmem:[%s291 + $0x6d8] sm:$0xff]
        %v576 = vld [vmem:[%s291 + $0x6e0] sm:$0xff]
        %v577 = vld [vmem:[%s291 + $0x6e8] sm:$0xff]
        %v578 = vld [vmem:[%s291 + $0x6f0] sm:$0xff]
        %v579 = vld [vmem:[%s291 + $0x6f8] sm:$0xff]
        %v580 = vld [vmem:[%s291 + $0x700] sm:$0xff]
        %v581 = vld [vmem:[%s291 + $0x708] sm:$0xff]
        %v582 = vld [vmem:[%s291 + $0x710] sm:$0xff]
        %v583 = vld [vmem:[%s291 + $0x718] sm:$0xff]
        %v584 = vld [vmem:[%s291 + $0x720] sm:$0xff]
        %v585 = vld [vmem:[%s291 + $0x728] sm:$0xff]
        %v586 = vld [vmem:[%s291 + $0x730] sm:$0xff]
        %v587 = vld [vmem:[%s291 + $0x738] sm:$0xff]
        %v588 = vld [vmem:[%s291 + $0x740] sm:$0xff]
        %v589 = vld [vmem:[%s291 + $0x748] sm:$0xff]
        %v590 = vld [vmem:[%s291 + $0x750] sm:$0xff]
        %v591 = vld [vmem:[%s291 + $0x758] sm:$0xff]
        %v592 = vld [vmem:[%s291 + $0x760] sm:$0xff]
        %v593 = vld [vmem:[%s291 + $0x768] sm:$0xff]
        %v594 = vld [vmem:[%s291 + $0x770] sm:$0xff]
        %v595 = vld [vmem:[%s291 + $0x778] sm:$0xff]
        %v596 = vld [vmem:[%s291 + $0x780] sm:$0xff]
        %v597 = vld [vmem:[%s291 + $0x788] sm:$0xff]
        %v598 = vld [vmem:[%s291 + $0x790] sm:$0xff]
        %v599 = vld [vmem:[%s291 + $0x798] sm:$0xff]
        %v600 = vld [vmem:[%s291 + $0x7a0] sm:$0xff]
        %v601 = vld [vmem:[%s291 + $0x7a8] sm:$0xff]
        %v602 = vld [vmem:[%s291 + $0x7b0] sm:$0xff]
        %v603 = vld [vmem:[%s291 + $0x7b8] sm:$0xff]
        %v604 = vld [vmem:[%s291 + $0x7c0] sm:$0xff]
        %v605 = vld [vmem:[%s291 + $0x7c8] sm:$0xff]
        %v606 = vld [vmem:[%s291 + $0x7d0] sm:$0xff]
        %v607 = vld [vmem:[%s291 + $0x7d8] sm:$0xff]
        %v608 = vld [vmem:[%s291 + $0x7e0] sm:$0xff]
        %v609 = vld [vmem:[%s291 + $0x7e8] sm:$0xff]
        %v610 = vld [vmem:[%s291 + $0x7f0] sm:$0xff]
        %v611 = vld [vmem:[%s291 + $0x7f8] sm:$0xff]
        %v612 = vld [vmem:[%s291 + $0x800] sm:$0xff]
        %v613 = vld [vmem:[%s291 + $0x808] sm:$0xff]
        %v614 = vld [vmem:[%s291 + $0x810] sm:$0xff]
        %v615 = vld [vmem:[%s291 + $0x818] sm:$0xff]
        %v616 = vld [vmem:[%s291 + $0x820] sm:$0xff]
        %v617 = vld [vmem:[%s291 + $0x828] sm:$0xff]
        %v618 = vld [vmem:[%s291 + $0x830] sm:$0xff]
        %v619 = vld [vmem:[%s291 + $0x838] sm:$0xff]
        %v620 = vld [vmem:[%s291 + $0x840] sm:$0xff]
        %v621 = vld [vmem:[%s291 + $0x848] sm:$0xff]
        %v622 = vld [vmem:[%s291 + $0x850] sm:$0xff]
        %v623 = vld [vmem:[%s291 + $0x858] sm:$0xff]
        %v624 = vld [vmem:[%s291 + $0x860] sm:$0xff]
        %v625 = vld [vmem:[%s291 + $0x868] sm:$0xff]
        %v626 = vld [vmem:[%s291 + $0x870] sm:$0xff]
        %v627 = vld [vmem:[%s291 + $0x878] sm:$0xff]
        %v628 = vld [vmem:[%s291 + $0x880] sm:$0xff]
        %v629 = vld [vmem:[%s291 + $0x888] sm:$0xff]
        %v630 = vld [vmem:[%s291 + $0x890] sm:$0xff]
        %v631 = vld [vmem:[%s291 + $0x898] sm:$0xff]
        %v632 = vld [vmem:[%s291 + $0x8a0] sm:$0xff]
        %v633 = vld [vmem:[%s291 + $0x8a8] sm:$0xff]
        %v634 = vld [vmem:[%s291 + $0x8b0] sm:$0xff]
        %v635 = vld [vmem:[%s291 + $0x8b8] sm:$0xff]
        %v636 = vld [vmem:[%s291 + $0x8c0] sm:$0xff]
        %v637 = vld [vmem:[%s291 + $0x8c8] sm:$0xff]
        %v638 = vld [vmem:[%s291 + $0x8d0] sm:$0xff]
        %v639 = vld [vmem:[%s291 + $0x8d8] sm:$0xff]
        %v640 = vld [vmem:[%s291 + $0x8e0] sm:$0xff]
        %v641 = vld [vmem:[%s291 + $0x8e8] sm:$0xff]
        %v642 = vld [vmem:[%s291 + $0x8f0] sm:$0xff]
        %v643 = vld [vmem:[%s291 + $0x8f8] sm:$0xff]
        %v644 = vld [vmem:[%s291 + $0x900] sm:$0xff]
        %v645 = vld [vmem:[%s291 + $0x908] sm:$0xff]
        %v646 = vld [vmem:[%s291 + $0x910] sm:$0xff]
        %v647 = vld [vmem:[%s291 + $0x918] sm:$0xff]
        %v648 = vld [vmem:[%s291 + $0x920] sm:$0xff]
        %v649 = vld [vmem:[%s291 + $0x928] sm:$0xff]
        %v650 = vld [vmem:[%s291 + $0x930] sm:$0xff]
        %v651 = vld [vmem:[%s291 + $0x938] sm:$0xff]
        %v652 = vld [vmem:[%s291 + $0x940] sm:$0xff]
        %v653 = vld [vmem:[%s291 + $0x948] sm:$0xff]
        %v654 = vld [vmem:[%s291 + $0x950] sm:$0xff]
        %v655 = vld [vmem:[%s291 + $0x958] sm:$0xff]
        %v656 = vld [vmem:[%s291 + $0x960] sm:$0xff]
        %v657 = vld [vmem:[%s291 + $0x968] sm:$0xff]
        %v658 = vld [vmem:[%s291 + $0x970] sm:$0xff]
        %v659 = vld [vmem:[%s291 + $0x978] sm:$0xff]
        %v660 = vld [vmem:[%s291 + $0x980] sm:$0xff]
        %v661 = vld [vmem:[%s291 + $0x988] sm:$0xff]
        %v662 = vld [vmem:[%s291 + $0x990] sm:$0xff]
        %v663 = vld [vmem:[%s291 + $0x998] sm:$0xff]
        %v664 = vld [vmem:[%s291 + $0x9a0] sm:$0xff]
        %v665 = vld [vmem:[%s291 + $0x9a8] sm:$0xff]
        %v666 = vld [vmem:[%s291 + $0x9b0] sm:$0xff]
        %v667 = vld [vmem:[%s291 + $0x9b8] sm:$0xff]
        %v668 = vld [vmem:[%s291 + $0x9c0] sm:$0xff]
        %v669 = vld [vmem:[%s291 + $0x9c8] sm:$0xff]
        %v670 = vld [vmem:[%s291 + $0x9d0] sm:$0xff]
        %v671 = vld [vmem:[%s291 + $0x9d8] sm:$0xff]
        %v672 = vld [vmem:[%s291 + $0x9e0] sm:$0xff]
        %v673 = vld [vmem:[%s291 + $0x9e8] sm:$0xff]
        %v674 = vld [vmem:[%s291 + $0x9f0] sm:$0xff]
        %v675 = vld [vmem:[%s291 + $0x9f8] sm:$0xff]
        %v676 = vld [vmem:[%s291 + $0xa00] sm:$0xff]
        %v677 = vld [vmem:[%s291 + $0xa08] sm:$0xff]
        %v678 = vld [vmem:[%s291 + $0xa10] sm:$0xff]
        %v679 = vld [vmem:[%s291 + $0xa18] sm:$0xff]
        %v680 = vld [vmem:[%s291 + $0xa20] sm:$0xff]
        %v681 = vld [vmem:[%s291 + $0xa28] sm:$0xff]
        %v682 = vld [vmem:[%s291 + $0xa30] sm:$0xff]
        %v683 = vld [vmem:[%s291 + $0xa38] sm:$0xff]
        %v684 = vld [vmem:[%s291 + $0xa40] sm:$0xff]
        %v685 = vld [vmem:[%s291 + $0xa48] sm:$0xff]
        %v686 = vld [vmem:[%s291 + $0xa50] sm:$0xff]
        %v687 = vld [vmem:[%s291 + $0xa58] sm:$0xff]
        %v688 = vld [vmem:[%s291 + $0xa60] sm:$0xff]
        %v689 = vld [vmem:[%s291 + $0xa68] sm:$0xff]
        %v690 = vld [vmem:[%s291 + $0xa70] sm:$0xff]
        %v691 = vld [vmem:[%s291 + $0xa78] sm:$0xff]
        %v692 = vld [vmem:[%s291 + $0xa80] sm:$0xff]
        %v693 = vld [vmem:[%s291 + $0xa88] sm:$0xff]
        %v694 = vld [vmem:[%s291 + $0xa90] sm:$0xff]
        %v695 = vld [vmem:[%s291 + $0xa98] sm:$0xff]
        %v696 = vld [vmem:[%s291 + $0xaa0] sm:$0xff]
        %v697 = vld [vmem:[%s291 + $0xaa8] sm:$0xff]
        %v698 = vld [vmem:[%s291 + $0xab0] sm:$0xff]
        %v699 = vld [vmem:[%s291 + $0xab8] sm:$0xff]
        %v700 = vld [vmem:[%s291 + $0xac0] sm:$0xff]
        %v701 = vld [vmem:[%s291 + $0xac8] sm:$0xff]
        %v702 = vld [vmem:[%s291 + $0xad0] sm:$0xff]
        %v703 = vld [vmem:[%s291 + $0xad8] sm:$0xff]
        %v704 = vld [vmem:[%s291 + $0xae0] sm:$0xff]
        %v705 = vld [vmem:[%s291 + $0xae8] sm:$0xff]
        %v706 = vld [vmem:[%s291 + $0xaf0] sm:$0xff]
        %v707 = vld [vmem:[%s291 + $0xaf8] sm:$0xff]
        %v708 = vld [vmem:[%s291 + $0xb00] sm:$0xff]
        %v709 = vld [vmem:[%s291 + $0xb08] sm:$0xff]
        %v710 = vld [vmem:[%s291 + $0xb10] sm:$0xff]
        %v711 = vld [vmem:[%s291 + $0xb18] sm:$0xff]
        %v712 = vld [vmem:[%s291 + $0xb20] sm:$0xff]
        %v713 = vld [vmem:[%s291 + $0xb28] sm:$0xff]
        %v714 = vld [vmem:[%s291 + $0xb30] sm:$0xff]
        %v715 = vld [vmem:[%s291 + $0xb38] sm:$0xff]
        %v716 = vld [vmem:[%s291 + $0xb40] sm:$0xff]
        %v717 = vld [vmem:[%s291 + $0xb48] sm:$0xff]
        %v718 = vld [vmem:[%s291 + $0xb50] sm:$0xff]
        %v719 = vld [vmem:[%s291 + $0xb58] sm:$0xff]
        %v720 = vld [vmem:[%s291 + $0xb60] sm:$0xff]
        %v721 = vld [vmem:[%s291 + $0xb68] sm:$0xff]
        %v722 = vld [vmem:[%s291 + $0xb70] sm:$0xff]
        %v723 = vld [vmem:[%s291 + $0xb78] sm:$0xff]
        %v724 = vld [vmem:[%s291 + $0xb80] sm:$0xff]
        %v725 = vld [vmem:[%s291 + $0xb88] sm:$0xff]
        %v726 = vld [vmem:[%s291 + $0xb90] sm:$0xff]
        %v727 = vld [vmem:[%s291 + $0xb98] sm:$0xff]
        %v728 = vld [vmem:[%s291 + $0xba0] sm:$0xff]
        %v729 = vld [vmem:[%s291 + $0xba8] sm:$0xff]
        %v730 = vld [vmem:[%s291 + $0xbb0] sm:$0xff]
        %v731 = vld [vmem:[%s291 + $0xbb8] sm:$0xff]
        %v732 = vld [vmem:[%s291 + $0xbc0] sm:$0xff]
        %v733 = vld [vmem:[%s291 + $0xbc8] sm:$0xff]
        %v734 = vld [vmem:[%s291 + $0xbd0] sm:$0xff]
        %v735 = vld [vmem:[%s291 + $0xbd8] sm:$0xff]
        %v736 = vld [vmem:[%s291 + $0xbe0] sm:$0xff]
        %v737 = vld [vmem:[%s291 + $0xbe8] sm:$0xff]
        %v738 = vld [vmem:[%s291 + $0xbf0] sm:$0xff]
        %v739 = vld [vmem:[%s291 + $0xbf8] sm:$0xff]
        %v740 = vld [vmem:[%s291 + $0xc00] sm:$0xff]
        %v741 = vld [vmem:[%s291 + $0xc08] sm:$0xff]
        %v742 = vld [vmem:[%s291 + $0xc10] sm:$0xff]
        %v743 = vld [vmem:[%s291 + $0xc18] sm:$0xff]
        %v744 = vld [vmem:[%s291 + $0xc20] sm:$0xff]
        %v745 = vld [vmem:[%s291 + $0xc28] sm:$0xff]
        %v746 = vld [vmem:[%s291 + $0xc30] sm:$0xff]
        %v747 = vld [vmem:[%s291 + $0xc38] sm:$0xff]
        %v748 = vld [vmem:[%s291 + $0xc40] sm:$0xff]
        %v749 = vld [vmem:[%s291 + $0xc48] sm:$0xff]
        %v750 = vld [vmem:[%s291 + $0xc50] sm:$0xff]
        %v751 = vld [vmem:[%s291 + $0xc58] sm:$0xff]
        %v752 = vld [vmem:[%s291 + $0xc60] sm:$0xff]
        %v753 = vld [vmem:[%s291 + $0xc68] sm:$0xff]
        %v754 = vld [vmem:[%s291 + $0xc70] sm:$0xff]
        %v755 = vld [vmem:[%s291 + $0xc78] sm:$0xff]
        %v756 = vld [vmem:[%s291 + $0xc80] sm:$0xff]
        %v757 = vld [vmem:[%s291 + $0xc88] sm:$0xff]
        %v758 = vld [vmem:[%s291 + $0xc90] sm:$0xff]
        %v759 = vld [vmem:[%s291 + $0xc98] sm:$0xff]
        %v760 = vld [vmem:[%s291 + $0xca0] sm:$0xff]
        %v761 = vld [vmem:[%s291 + $0xca8] sm:$0xff]
        %v762 = vld [vmem:[%s291 + $0xcb0] sm:$0xff]
        %v763 = vld [vmem:[%s291 + $0xcb8] sm:$0xff]
        %v764 = vld [vmem:[%s291 + $0xcc0] sm:$0xff]
        %v765 = vld [vmem:[%s291 + $0xcc8] sm:$0xff]
        %v766 = vld [vmem:[%s291 + $0xcd0] sm:$0xff]
        %v767 = vld [vmem:[%s291 + $0xcd8] sm:$0xff]
        %v768 = vld [vmem:[%s291 + $0xce0] sm:$0xff]
        %v769 = vld [vmem:[%s291 + $0xce8] sm:$0xff]
        %v770 = vld [vmem:[%s291 + $0xcf0] sm:$0xff]
        %v771 = vld [vmem:[%s291 + $0xcf8] sm:$0xff]
        %v772 = vld [vmem:[%s291 + $0xd00] sm:$0xff]
        %v773 = vld [vmem:[%s291 + $0xd08] sm:$0xff]
        %v774 = vld [vmem:[%s291 + $0xd10] sm:$0xff]
        %v775 = vld [vmem:[%s291 + $0xd18] sm:$0xff]
        %v776 = vld [vmem:[%s291 + $0xd20] sm:$0xff]
        %v777 = vld [vmem:[%s291 + $0xd28] sm:$0xff]
        %v778 = vld [vmem:[%s291 + $0xd30] sm:$0xff]
        %v779 = vld [vmem:[%s291 + $0xd38] sm:$0xff]
        %v780 = vld [vmem:[%s291 + $0xd40] sm:$0xff]
        %v781 = vld [vmem:[%s291 + $0xd48] sm:$0xff]
        %v782 = vld [vmem:[%s291 + $0xd50] sm:$0xff]
        %v783 = vld [vmem:[%s291 + $0xd58] sm:$0xff]
        %v784 = vld [vmem:[%s291 + $0xd60] sm:$0xff]
        %v785 = vld [vmem:[%s291 + $0xd68] sm:$0xff]
        %v786 = vld [vmem:[%s291 + $0xd70] sm:$0xff]
        %v787 = vld [vmem:[%s291 + $0xd78] sm:$0xff]
        %v788 = vld [vmem:[%s291 + $0xd80] sm:$0xff]
        %v789 = vld [vmem:[%s291 + $0xd88] sm:$0xff]
        %v790 = vld [vmem:[%s291 + $0xd90] sm:$0xff]
        %v791 = vld [vmem:[%s291 + $0xd98] sm:$0xff]
        %v792 = vld [vmem:[%s291 + $0xda0] sm:$0xff]
        %v793 = vld [vmem:[%s291 + $0xda8] sm:$0xff]
        %v794 = vld [vmem:[%s291 + $0xdb0] sm:$0xff]
        %v795 = vld [vmem:[%s291 + $0xdb8] sm:$0xff]
        %v796 = vld [vmem:[%s291 + $0xdc0] sm:$0xff]
        %v797 = vld [vmem:[%s291 + $0xdc8] sm:$0xff]
        %v798 = vld [vmem:[%s291 + $0xdd0] sm:$0xff]
        %v799 = vld [vmem:[%s291 + $0xdd8] sm:$0xff]
        %v800 = vld [vmem:[%s291 + $0xde0] sm:$0xff]
        %v801 = vld [vmem:[%s291 + $0xde8] sm:$0xff]
        %v802 = vld [vmem:[%s291 + $0xdf0] sm:$0xff]
        %v803 = vld [vmem:[%s291 + $0xdf8] sm:$0xff]
        %v804 = vld [vmem:[%s291 + $0xe00] sm:$0xff]
        %v805 = vld [vmem:[%s291 + $0xe08] sm:$0xff]
        %v806 = vld [vmem:[%s291 + $0xe10] sm:$0xff]
        %v807 = vld [vmem:[%s291 + $0xe18] sm:$0xff]
        %v808 = vld [vmem:[%s291 + $0xe20] sm:$0xff]
        %v809 = vld [vmem:[%s291 + $0xe28] sm:$0xff]
        %v810 = vld [vmem:[%s291 + $0xe30] sm:$0xff]
        %v811 = vld [vmem:[%s291 + $0xe38] sm:$0xff]
        %v812 = vld [vmem:[%s291 + $0xe40] sm:$0xff]
        %v813 = vld [vmem:[%s291 + $0xe48] sm:$0xff]
        %v814 = vld [vmem:[%s291 + $0xe50] sm:$0xff]
        %v815 = vld [vmem:[%s291 + $0xe58] sm:$0xff]
        %v816 = vld [vmem:[%s291 + $0xe60] sm:$0xff]
        %v817 = vld [vmem:[%s291 + $0xe68] sm:$0xff]
        %v818 = vld [vmem:[%s291 + $0xe70] sm:$0xff]
        %v819 = vld [vmem:[%s291 + $0xe78] sm:$0xff]
        %v820 = vld [vmem:[%s291 + $0xe80] sm:$0xff]
        %v821 = vld [vmem:[%s291 + $0xe88] sm:$0xff]
        %v822 = vld [vmem:[%s291 + $0xe90] sm:$0xff]
        %v823 = vld [vmem:[%s291 + $0xe98] sm:$0xff]
        %v824 = vld [vmem:[%s291 + $0xea0] sm:$0xff]
        %v825 = vld [vmem:[%s291 + $0xea8] sm:$0xff]
        %v826 = vld [vmem:[%s291 + $0xeb0] sm:$0xff]
        %v827 = vld [vmem:[%s291 + $0xeb8] sm:$0xff]
        %v828 = vld [vmem:[%s291 + $0xec0] sm:$0xff]
        %v829 = vld [vmem:[%s291 + $0xec8] sm:$0xff]
        %v830 = vld [vmem:[%s291 + $0xed0] sm:$0xff]
        %v831 = vld [vmem:[%s291 + $0xed8] sm:$0xff]
        %v832 = vld [vmem:[%s291 + $0xee0] sm:$0xff]
        %v833 = vld [vmem:[%s291 + $0xee8] sm:$0xff]
        %v834 = vld [vmem:[%s291 + $0xef0] sm:$0xff]
        %v835 = vld [vmem:[%s291 + $0xef8] sm:$0xff]
        %v836 = vld [vmem:[%s291 + $0xf00] sm:$0xff]
        %v837 = vld [vmem:[%s291 + $0xf08] sm:$0xff]
        %v838 = vld [vmem:[%s291 + $0xf10] sm:$0xff]
        %v839 = vld [vmem:[%s291 + $0xf18] sm:$0xff]
        %v840 = vld [vmem:[%s291 + $0xf20] sm:$0xff]
        %v841 = vld [vmem:[%s291 + $0xf28] sm:$0xff]
        %v842 = vld [vmem:[%s291 + $0xf30] sm:$0xff]
        %v843 = vld [vmem:[%s291 + $0xf38] sm:$0xff]
        %v844 = vld [vmem:[%s291 + $0xf40] sm:$0xff]
        %v845 = vld [vmem:[%s291 + $0xf48] sm:$0xff]
        %v846 = vld [vmem:[%s291 + $0xf50] sm:$0xff]
        %v847 = vld [vmem:[%s291 + $0xf58] sm:$0xff]
        %v848 = vld [vmem:[%s291 + $0xf60] sm:$0xff]
        %v849 = vld [vmem:[%s291 + $0xf68] sm:$0xff]
        %v850 = vld [vmem:[%s291 + $0xf70] sm:$0xff]
        %v851 = vld [vmem:[%s291 + $0xf78] sm:$0xff]
        %v852 = vld [vmem:[%s291 + $0xf80] sm:$0xff]
        %v853 = vld [vmem:[%s291 + $0xf88] sm:$0xff]
        %v854 = vld [vmem:[%s291 + $0xf90] sm:$0xff]
        %v855 = vld [vmem:[%s291 + $0xf98] sm:$0xff]
        %v856 = vld [vmem:[%s291 + $0xfa0] sm:$0xff]
        %v857 = vld [vmem:[%s291 + $0xfa8] sm:$0xff]
        %v858 = vld [vmem:[%s291 + $0xfb0] sm:$0xff]
        %v859 = vld [vmem:[%s291 + $0xfb8] sm:$0xff]
        %v860 = vld [vmem:[%s291 + $0xfc0] sm:$0xff]
        %v861 = vld [vmem:[%s291 + $0xfc8] sm:$0xff]
        %v862 = vld [vmem:[%s291 + $0xfd0] sm:$0xff]
        %v863 = vld [vmem:[%s291 + $0xfd8] sm:$0xff]
        %v864 = vld [vmem:[%s291 + $0xfe0] sm:$0xff]
        %v865 = vld [vmem:[%s291 + $0xfe8] sm:$0xff]
        %v866 = vld [vmem:[%s291 + $0xff0] sm:$0xff]
        %v867 = vld [vmem:[%s291 + $0xff8] sm:$0xff]
        %868 = vmatprep.subr.mxu0 %v477
        %869 = vmatpush1.msra.mxu0 %v476
        %870 = vmatprep.subr.mxu0 %v469
        %871 = vmatpush1.msra.mxu0 %v468
        %872 = vmatprep.subr.mxu0 %v461
        %873 = vmatpush1.msra.mxu0 %v460
        %874 = vmatprep.subr.mxu0 %v453
        %875 = vmatpush1.msra.mxu0 %v452
        %876 = vmatprep.subr.mxu0 %v445
        %877 = vmatpush1.msra.mxu0 %v444
        %878 = vmatprep.subr.mxu0 %v437
        %879 = vmatpush1.msra.mxu0 %v436
        %880 = vmatprep.subr.mxu0 %v429
        %881 = vmatpush1.msra.mxu0 %v428
        %882 = vmatprep.subr.mxu0 %v421
        %883 = vmatpush1.msra.mxu0 %v420
        %884 = vmatprep.subr.mxu0 %v413
        %885 = vmatpush1.msra.mxu0 %v412
        %886 = vmatprep.subr.mxu0 %v405
        %887 = vmatpush1.msra.mxu0 %v404
        %888 = vmatprep.subr.mxu0 %v397
        %889 = vmatpush1.msra.mxu0 %v396
        %890 = vmatprep.subr.mxu0 %v389
        %891 = vmatpush1.msra.mxu0 %v388
        %892 = vmatprep.subr.mxu0 %v381
        %893 = vmatpush1.msra.mxu0 %v380
        %894 = vmatprep.subr.mxu0 %v373
        %895 = vmatpush1.msra.mxu0 %v372
        %896 = vmatprep.subr.mxu0 %v365
        %897 = vmatpush1.msra.mxu0 %v364
        %898 = vmatprep.subr.mxu0 %v357
        %899 = vmatpush1.msra.mxu0 %v356
        %900 = vmatprep.subr.mxu0 %v605
        %901 = vmatpush2.msra.mxu0 %v604
        %902 = vmatprep.subr.mxu0 %v597
        %903 = vmatpush2.msra.mxu0 %v596
        %904 = vmatprep.subr.mxu0 %v589
        %905 = vmatpush2.msra.mxu0 %v588
        %906 = vmatprep.subr.mxu0 %v581
        %907 = vmatpush2.msra.mxu0 %v580
        %908 = vmatprep.subr.mxu0 %v573
        %909 = vmatpush2.msra.mxu0 %v572
        %910 = vmatprep.subr.mxu0 %v565
        %911 = vmatpush2.msra.mxu0 %v564
        %912 = vmatprep.subr.mxu0 %v557
        %913 = vmatpush2.msra.mxu0 %v556
        %914 = vmatprep.subr.mxu0 %v549
        %915 = vmatpush2.msra.mxu0 %v548
        %916 = vmatprep.subr.mxu0 %v541
        %917 = vmatpush2.msra.mxu0 %v540
        %918 = vmatprep.subr.mxu0 %v533
        %919 = vmatpush2.msra.mxu0 %v532
        %920 = vmatprep.subr.mxu0 %v525
        %921 = vmatpush2.msra.mxu0 %v524
        %922 = vmatprep.subr.mxu0 %v517
        %923 = vmatpush2.msra.mxu0 %v516
        %924 = vmatprep.subr.mxu0 %v509
        %925 = vmatpush2.msra.mxu0 %v508
        %926 = vmatprep.subr.mxu0 %v501
        %927 = vmatpush2.msra.mxu0 %v500
        %928 = vmatprep.subr.mxu0 %v493
        %929 = vmatpush2.msra.mxu0 %v492
        %930 = vmatprep.subr.mxu0 %v485
        %931 = vmatpush2.msra.mxu0 %v484
        %932 = vmatprep.mubr.f32.mxu0 %v353
        %933 = vmatmul.mubr.f32.gmra.mxu0 %v352
        %v934 = vpop.f32.mrf.mxu0
        %v935 = vadd.f32 0.0, %v934
        %v936 = vpop.f32.mrf.mxu0
        %v937 = vadd.f32 0.0, %v936
        %938 = vdwg.mxu0
        %939 = vmatprep.subr.mxu0 %v733
        %940 = vmatpush1.msra.mxu0 %v732
        %941 = vmatprep.subr.mxu0 %v725
        %942 = vmatpush1.msra.mxu0 %v724
        %943 = vmatprep.subr.mxu0 %v717
        %944 = vmatpush1.msra.mxu0 %v716
        %945 = vmatprep.subr.mxu0 %v709
        %946 = vmatpush1.msra.mxu0 %v708
        %947 = vmatprep.subr.mxu0 %v701
        %948 = vmatpush1.msra.mxu0 %v700
        %949 = vmatprep.subr.mxu0 %v693
        %950 = vmatpush1.msra.mxu0 %v692
        %951 = vmatprep.subr.mxu0 %v685
        %952 = vmatpush1.msra.mxu0 %v684
        %953 = vmatprep.subr.mxu0 %v677
        %954 = vmatpush1.msra.mxu0 %v676
        %955 = vmatprep.subr.mxu0 %v669
        %956 = vmatpush1.msra.mxu0 %v668
        %957 = vmatprep.subr.mxu0 %v661
        %958 = vmatpush1.msra.mxu0 %v660
        %959 = vmatprep.subr.mxu0 %v653
        %960 = vmatpush1.msra.mxu0 %v652
        %961 = vmatprep.subr.mxu0 %v645
        %962 = vmatpush1.msra.mxu0 %v644
        %963 = vmatprep.subr.mxu0 %v637
        %964 = vmatpush1.msra.mxu0 %v636
        %965 = vmatprep.subr.mxu0 %v629
        %966 = vmatpush1.msra.mxu0 %v628
        %967 = vmatprep.subr.mxu0 %v621
        %968 = vmatpush1.msra.mxu0 %v620
        %969 = vmatprep.subr.mxu0 %v613
        %970 = vmatpush1.msra.mxu0 %v612
        %971 = vmatprep.subr.mxu0 %v861
        %972 = vmatpush2.msra.mxu0 %v860
        %973 = vmatprep.subr.mxu0 %v853
        %974 = vmatpush2.msra.mxu0 %v852
        %975 = vmatprep.subr.mxu0 %v845
        %976 = vmatpush2.msra.mxu0 %v844
        %977 = vmatprep.subr.mxu0 %v837
        %978 = vmatpush2.msra.mxu0 %v836
        %979 = vmatprep.subr.mxu0 %v829
        %980 = vmatpush2.msra.mxu0 %v828
        %981 = vmatprep.subr.mxu0 %v821
        %982 = vmatpush2.msra.mxu0 %v820
        %983 = vmatprep.subr.mxu0 %v813
        %984 = vmatpush2.msra.mxu0 %v812
        %985 = vmatprep.subr.mxu0 %v805
        %986 = vmatpush2.msra.mxu0 %v804
        %987 = vmatprep.subr.mxu0 %v797
        %988 = vmatpush2.msra.mxu0 %v796
        %989 = vmatprep.subr.mxu0 %v789
        %990 = vmatpush2.msra.mxu0 %v788
        %991 = vmatprep.subr.mxu0 %v781
        %992 = vmatpush2.msra.mxu0 %v780
        %993 = vmatprep.subr.mxu0 %v773
        %994 = vmatpush2.msra.mxu0 %v772
        %995 = vmatprep.subr.mxu0 %v765
        %996 = vmatpush2.msra.mxu0 %v764
        %997 = vmatprep.subr.mxu0 %v757
        %998 = vmatpush2.msra.mxu0 %v756
        %999 = vmatprep.subr.mxu0 %v749
        %1000 = vmatpush2.msra.mxu0 %v748
        %1001 = vmatprep.subr.mxu0 %v741
        %1002 = vmatpush2.msra.mxu0 %v740
        %1003 = vmatprep.mubr.f32.mxu0 %v355
        %1004 = vmatmul.mubr.f32.gmra.mxu0 %v354
        %v1005 = vpop.f32.mrf.mxu0
        %v1006 = vadd.f32 %v935, %v1005
        %v1007 = vpop.f32.mrf.mxu0
        %v1008 = vadd.f32 %v937, %v1007
        %1009 = vdwg.mxu0
        %1010 = vmatprep.subr.mxu0 %v479
        %1011 = vmatpush1.msra.mxu0 %v478
        %1012 = vmatprep.subr.mxu0 %v471
        %1013 = vmatpush1.msra.mxu0 %v470
        %1014 = vmatprep.subr.mxu0 %v463
        %1015 = vmatpush1.msra.mxu0 %v462
        %1016 = vmatprep.subr.mxu0 %v455
        %1017 = vmatpush1.msra.mxu0 %v454
        %1018 = vmatprep.subr.mxu0 %v447
        %1019 = vmatpush1.msra.mxu0 %v446
        %1020 = vmatprep.subr.mxu0 %v439
        %1021 = vmatpush1.msra.mxu0 %v438
        %1022 = vmatprep.subr.mxu0 %v431
        %1023 = vmatpush1.msra.mxu0 %v430
        %1024 = vmatprep.subr.mxu0 %v423
        %1025 = vmatpush1.msra.mxu0 %v422
        %1026 = vmatprep.subr.mxu0 %v415
        %1027 = vmatpush1.msra.mxu0 %v414
        %1028 = vmatprep.subr.mxu0 %v407
        %1029 = vmatpush1.msra.mxu0 %v406
        %1030 = vmatprep.subr.mxu0 %v399
        %1031 = vmatpush1.msra.mxu0 %v398
        %1032 = vmatprep.subr.mxu0 %v391
        %1033 = vmatpush1.msra.mxu0 %v390
        %1034 = vmatprep.subr.mxu0 %v383
        %1035 = vmatpush1.msra.mxu0 %v382
        %1036 = vmatprep.subr.mxu0 %v375
        %1037 = vmatpush1.msra.mxu0 %v374
        %1038 = vmatprep.subr.mxu0 %v367
        %1039 = vmatpush1.msra.mxu0 %v366
        %1040 = vmatprep.subr.mxu0 %v359
        %1041 = vmatpush1.msra.mxu0 %v358
        %1042 = vmatprep.subr.mxu0 %v607
        %1043 = vmatpush2.msra.mxu0 %v606
        %1044 = vmatprep.subr.mxu0 %v599
        %1045 = vmatpush2.msra.mxu0 %v598
        %1046 = vmatprep.subr.mxu0 %v591
        %1047 = vmatpush2.msra.mxu0 %v590
        %1048 = vmatprep.subr.mxu0 %v583
        %1049 = vmatpush2.msra.mxu0 %v582
        %1050 = vmatprep.subr.mxu0 %v575
        %1051 = vmatpush2.msra.mxu0 %v574
        %1052 = vmatprep.subr.mxu0 %v567
        %1053 = vmatpush2.msra.mxu0 %v566
        %1054 = vmatprep.subr.mxu0 %v559
        %1055 = vmatpush2.msra.mxu0 %v558
        %1056 = vmatprep.subr.mxu0 %v551
        %1057 = vmatpush2.msra.mxu0 %v550
        %1058 = vmatprep.subr.mxu0 %v543
        %1059 = vmatpush2.msra.mxu0 %v542
        %1060 = vmatprep.subr.mxu0 %v535
        %1061 = vmatpush2.msra.mxu0 %v534
        %1062 = vmatprep.subr.mxu0 %v527
        %1063 = vmatpush2.msra.mxu0 %v526
        %1064 = vmatprep.subr.mxu0 %v519
        %1065 = vmatpush2.msra.mxu0 %v518
        %1066 = vmatprep.subr.mxu0 %v511
        %1067 = vmatpush2.msra.mxu0 %v510
        %1068 = vmatprep.subr.mxu0 %v503
        %1069 = vmatpush2.msra.mxu0 %v502
        %1070 = vmatprep.subr.mxu0 %v495
        %1071 = vmatpush2.msra.mxu0 %v494
        %1072 = vmatprep.subr.mxu0 %v487
        %1073 = vmatpush2.msra.mxu0 %v486
        %1074 = vmatprep.mubr.f32.mxu0 %v353
        %1075 = vmatmul.mubr.f32.gmra.mxu0 %v352
        %v1076 = vpop.f32.mrf.mxu0
        %v1077 = vadd.f32 0.0, %v1076
        %v1078 = vpop.f32.mrf.mxu0
        %v1079 = vadd.f32 0.0, %v1078
        %1080 = vdwg.mxu0
        %1081 = vmatprep.subr.mxu0 %v735
        %1082 = vmatpush1.msra.mxu0 %v734
        %1083 = vmatprep.subr.mxu0 %v727
        %1084 = vmatpush1.msra.mxu0 %v726
        %1085 = vmatprep.subr.mxu0 %v719
        %1086 = vmatpush1.msra.mxu0 %v718
        %1087 = vmatprep.subr.mxu0 %v711
        %1088 = vmatpush1.msra.mxu0 %v710
        %1089 = vmatprep.subr.mxu0 %v703
        %1090 = vmatpush1.msra.mxu0 %v702
        %1091 = vmatprep.subr.mxu0 %v695
        %1092 = vmatpush1.msra.mxu0 %v694
        %1093 = vmatprep.subr.mxu0 %v687
        %1094 = vmatpush1.msra.mxu0 %v686
        %1095 = vmatprep.subr.mxu0 %v679
        %1096 = vmatpush1.msra.mxu0 %v678
        %1097 = vmatprep.subr.mxu0 %v671
        %1098 = vmatpush1.msra.mxu0 %v670
        %1099 = vmatprep.subr.mxu0 %v663
        %1100 = vmatpush1.msra.mxu0 %v662
        %1101 = vmatprep.subr.mxu0 %v655
        %1102 = vmatpush1.msra.mxu0 %v654
        %1103 = vmatprep.subr.mxu0 %v647
        %1104 = vmatpush1.msra.mxu0 %v646
        %1105 = vmatprep.subr.mxu0 %v639
        %1106 = vmatpush1.msra.mxu0 %v638
        %1107 = vmatprep.subr.mxu0 %v631
        %1108 = vmatpush1.msra.mxu0 %v630
        %1109 = vmatprep.subr.mxu0 %v623
        %1110 = vmatpush1.msra.mxu0 %v622
        %1111 = vmatprep.subr.mxu0 %v615
        %1112 = vmatpush1.msra.mxu0 %v614
        %1113 = vmatprep.subr.mxu0 %v863
        %1114 = vmatpush2.msra.mxu0 %v862
        %1115 = vmatprep.subr.mxu0 %v855
        %1116 = vmatpush2.msra.mxu0 %v854
        %1117 = vmatprep.subr.mxu0 %v847
        %1118 = vmatpush2.msra.mxu0 %v846
        %1119 = vmatprep.subr.mxu0 %v839
        %1120 = vmatpush2.msra.mxu0 %v838
        %1121 = vmatprep.subr.mxu0 %v831
        %1122 = vmatpush2.msra.mxu0 %v830
        %1123 = vmatprep.subr.mxu0 %v823
        %1124 = vmatpush2.msra.mxu0 %v822
        %1125 = vmatprep.subr.mxu0 %v815
        %1126 = vmatpush2.msra.mxu0 %v814
        %1127 = vmatprep.subr.mxu0 %v807
        %1128 = vmatpush2.msra.mxu0 %v806
        %1129 = vmatprep.subr.mxu0 %v799
        %1130 = vmatpush2.msra.mxu0 %v798
        %1131 = vmatprep.subr.mxu0 %v791
        %1132 = vmatpush2.msra.mxu0 %v790
        %1133 = vmatprep.subr.mxu0 %v783
        %1134 = vmatpush2.msra.mxu0 %v782
        %1135 = vmatprep.subr.mxu0 %v775
        %1136 = vmatpush2.msra.mxu0 %v774
        %1137 = vmatprep.subr.mxu0 %v767
        %1138 = vmatpush2.msra.mxu0 %v766
        %1139 = vmatprep.subr.mxu0 %v759
        %1140 = vmatpush2.msra.mxu0 %v758
        %1141 = vmatprep.subr.mxu0 %v751
        %1142 = vmatpush2.msra.mxu0 %v750
        %1143 = vmatprep.subr.mxu0 %v743
        %1144 = vmatpush2.msra.mxu0 %v742
        %1145 = vmatprep.mubr.f32.mxu0 %v355
        %1146 = vmatmul.mubr.f32.gmra.mxu0 %v354
        %v1147 = vpop.f32.mrf.mxu0
        %v1148 = vadd.f32 %v1077, %v1147
        %v1149 = vpop.f32.mrf.mxu0
        %v1150 = vadd.f32 %v1079, %v1149
        %1151 = vdwg.mxu0
        %1152 = vmatprep.subr.mxu0 %v481
        %1153 = vmatpush1.msra.mxu0 %v480
        %1154 = vmatprep.subr.mxu0 %v473
        %1155 = vmatpush1.msra.mxu0 %v472
        %1156 = vmatprep.subr.mxu0 %v465
        %1157 = vmatpush1.msra.mxu0 %v464
        %1158 = vmatprep.subr.mxu0 %v457
        %1159 = vmatpush1.msra.mxu0 %v456
        %1160 = vmatprep.subr.mxu0 %v449
        %1161 = vmatpush1.msra.mxu0 %v448
        %1162 = vmatprep.subr.mxu0 %v441
        %1163 = vmatpush1.msra.mxu0 %v440
        %1164 = vmatprep.subr.mxu0 %v433
        %1165 = vmatpush1.msra.mxu0 %v432
        %1166 = vmatprep.subr.mxu0 %v425
        %1167 = vmatpush1.msra.mxu0 %v424
        %1168 = vmatprep.subr.mxu0 %v417
        %1169 = vmatpush1.msra.mxu0 %v416
        %1170 = vmatprep.subr.mxu0 %v409
        %1171 = vmatpush1.msra.mxu0 %v408
        %1172 = vmatprep.subr.mxu0 %v401
        %1173 = vmatpush1.msra.mxu0 %v400
        %1174 = vmatprep.subr.mxu0 %v393
        %1175 = vmatpush1.msra.mxu0 %v392
        %1176 = vmatprep.subr.mxu0 %v385
        %1177 = vmatpush1.msra.mxu0 %v384
        %1178 = vmatprep.subr.mxu0 %v377
        %1179 = vmatpush1.msra.mxu0 %v376
        %1180 = vmatprep.subr.mxu0 %v369
        %1181 = vmatpush1.msra.mxu0 %v368
        %1182 = vmatprep.subr.mxu0 %v361
        %1183 = vmatpush1.msra.mxu0 %v360
        %1184 = vmatprep.subr.mxu0 %v609
        %1185 = vmatpush2.msra.mxu0 %v608
        %1186 = vmatprep.subr.mxu0 %v601
        %1187 = vmatpush2.msra.mxu0 %v600
        %1188 = vmatprep.subr.mxu0 %v593
        %1189 = vmatpush2.msra.mxu0 %v592
        %1190 = vmatprep.subr.mxu0 %v585
        %1191 = vmatpush2.msra.mxu0 %v584
        %1192 = vmatprep.subr.mxu0 %v577
        %1193 = vmatpush2.msra.mxu0 %v576
        %1194 = vmatprep.subr.mxu0 %v569
        %1195 = vmatpush2.msra.mxu0 %v568
        %1196 = vmatprep.subr.mxu0 %v561
        %1197 = vmatpush2.msra.mxu0 %v560
        %1198 = vmatprep.subr.mxu0 %v553
        %1199 = vmatpush2.msra.mxu0 %v552
        %1200 = vmatprep.subr.mxu0 %v545
        %1201 = vmatpush2.msra.mxu0 %v544
        %1202 = vmatprep.subr.mxu0 %v537
        %1203 = vmatpush2.msra.mxu0 %v536
        %1204 = vmatprep.subr.mxu0 %v529
        %1205 = vmatpush2.msra.mxu0 %v528
        %1206 = vmatprep.subr.mxu0 %v521
        %1207 = vmatpush2.msra.mxu0 %v520
        %1208 = vmatprep.subr.mxu0 %v513
        %1209 = vmatpush2.msra.mxu0 %v512
        %1210 = vmatprep.subr.mxu0 %v505
        %1211 = vmatpush2.msra.mxu0 %v504
        %1212 = vmatprep.subr.mxu0 %v497
        %1213 = vmatpush2.msra.mxu0 %v496
        %1214 = vmatprep.subr.mxu0 %v489
        %1215 = vmatpush2.msra.mxu0 %v488
        %1216 = vmatprep.mubr.f32.mxu0 %v353
        %1217 = vmatmul.mubr.f32.gmra.mxu0 %v352
        %v1218 = vpop.f32.mrf.mxu0
        %v1219 = vadd.f32 0.0, %v1218
        %v1220 = vpop.f32.mrf.mxu0
        %v1221 = vadd.f32 0.0, %v1220
        %1222 = vdwg.mxu0
        %1223 = vmatprep.subr.mxu0 %v737
        %1224 = vmatpush1.msra.mxu0 %v736
        %1225 = vmatprep.subr.mxu0 %v729
        %1226 = vmatpush1.msra.mxu0 %v728
        %1227 = vmatprep.subr.mxu0 %v721
        %1228 = vmatpush1.msra.mxu0 %v720
        %1229 = vmatprep.subr.mxu0 %v713
        %1230 = vmatpush1.msra.mxu0 %v712
        %1231 = vmatprep.subr.mxu0 %v705
        %1232 = vmatpush1.msra.mxu0 %v704
        %1233 = vmatprep.subr.mxu0 %v697
        %1234 = vmatpush1.msra.mxu0 %v696
        %1235 = vmatprep.subr.mxu0 %v689
        %1236 = vmatpush1.msra.mxu0 %v688
        %1237 = vmatprep.subr.mxu0 %v681
        %1238 = vmatpush1.msra.mxu0 %v680
        %1239 = vmatprep.subr.mxu0 %v673
        %1240 = vmatpush1.msra.mxu0 %v672
        %1241 = vmatprep.subr.mxu0 %v665
        %1242 = vmatpush1.msra.mxu0 %v664
        %1243 = vmatprep.subr.mxu0 %v657
        %1244 = vmatpush1.msra.mxu0 %v656
        %1245 = vmatprep.subr.mxu0 %v649
        %1246 = vmatpush1.msra.mxu0 %v648
        %1247 = vmatprep.subr.mxu0 %v641
        %1248 = vmatpush1.msra.mxu0 %v640
        %1249 = vmatprep.subr.mxu0 %v633
        %1250 = vmatpush1.msra.mxu0 %v632
        %1251 = vmatprep.subr.mxu0 %v625
        %1252 = vmatpush1.msra.mxu0 %v624
        %1253 = vmatprep.subr.mxu0 %v617
        %1254 = vmatpush1.msra.mxu0 %v616
        %1255 = vmatprep.subr.mxu0 %v865
        %1256 = vmatpush2.msra.mxu0 %v864
        %1257 = vmatprep.subr.mxu0 %v857
        %1258 = vmatpush2.msra.mxu0 %v856
        %1259 = vmatprep.subr.mxu0 %v849
        %1260 = vmatpush2.msra.mxu0 %v848
        %1261 = vmatprep.subr.mxu0 %v841
        %1262 = vmatpush2.msra.mxu0 %v840
        %1263 = vmatprep.subr.mxu0 %v833
        %1264 = vmatpush2.msra.mxu0 %v832
        %1265 = vmatprep.subr.mxu0 %v825
        %1266 = vmatpush2.msra.mxu0 %v824
        %1267 = vmatprep.subr.mxu0 %v817
        %1268 = vmatpush2.msra.mxu0 %v816
        %1269 = vmatprep.subr.mxu0 %v809
        %1270 = vmatpush2.msra.mxu0 %v808
        %1271 = vmatprep.subr.mxu0 %v801
        %1272 = vmatpush2.msra.mxu0 %v800
        %1273 = vmatprep.subr.mxu0 %v793
        %1274 = vmatpush2.msra.mxu0 %v792
        %1275 = vmatprep.subr.mxu0 %v785
        %1276 = vmatpush2.msra.mxu0 %v784
        %1277 = vmatprep.subr.mxu0 %v777
        %1278 = vmatpush2.msra.mxu0 %v776
        %1279 = vmatprep.subr.mxu0 %v769
        %1280 = vmatpush2.msra.mxu0 %v768
        %1281 = vmatprep.subr.mxu0 %v761
        %1282 = vmatpush2.msra.mxu0 %v760
        %1283 = vmatprep.subr.mxu0 %v753
        %1284 = vmatpush2.msra.mxu0 %v752
        %1285 = vmatprep.subr.mxu0 %v745
        %1286 = vmatpush2.msra.mxu0 %v744
        %1287 = vmatprep.mubr.f32.mxu0 %v355
        %1288 = vmatmul.mubr.f32.gmra.mxu0 %v354
        %v1289 = vpop.f32.mrf.mxu0
        %v1290 = vadd.f32 %v1219, %v1289
        %v1291 = vpop.f32.mrf.mxu0
        %v1292 = vadd.f32 %v1221, %v1291
        %1293 = vdwg.mxu0
        %1294 = vmatprep.subr.mxu0 %v483
        %1295 = vmatpush1.msra.mxu0 %v482
        %1296 = vmatprep.subr.mxu0 %v475
        %1297 = vmatpush1.msra.mxu0 %v474
        %1298 = vmatprep.subr.mxu0 %v467
        %1299 = vmatpush1.msra.mxu0 %v466
        %1300 = vmatprep.subr.mxu0 %v459
        %1301 = vmatpush1.msra.mxu0 %v458
        %1302 = vmatprep.subr.mxu0 %v451
        %1303 = vmatpush1.msra.mxu0 %v450
        %1304 = vmatprep.subr.mxu0 %v443
        %1305 = vmatpush1.msra.mxu0 %v442
        %1306 = vmatprep.subr.mxu0 %v435
        %1307 = vmatpush1.msra.mxu0 %v434
        %1308 = vmatprep.subr.mxu0 %v427
        %1309 = vmatpush1.msra.mxu0 %v426
        %1310 = vmatprep.subr.mxu0 %v419
        %1311 = vmatpush1.msra.mxu0 %v418
        %1312 = vmatprep.subr.mxu0 %v411
        %1313 = vmatpush1.msra.mxu0 %v410
        %1314 = vmatprep.subr.mxu0 %v403
        %1315 = vmatpush1.msra.mxu0 %v402
        %1316 = vmatprep.subr.mxu0 %v395
        %1317 = vmatpush1.msra.mxu0 %v394
        %1318 = vmatprep.subr.mxu0 %v387
        %1319 = vmatpush1.msra.mxu0 %v386
        %1320 = vmatprep.subr.mxu0 %v379
        %1321 = vmatpush1.msra.mxu0 %v378
        %1322 = vmatprep.subr.mxu0 %v371
        %1323 = vmatpush1.msra.mxu0 %v370
        %1324 = vmatprep.subr.mxu0 %v363
        %1325 = vmatpush1.msra.mxu0 %v362
        %1326 = vmatprep.subr.mxu0 %v611
        %1327 = vmatpush2.msra.mxu0 %v610
        %1328 = vmatprep.subr.mxu0 %v603
        %1329 = vmatpush2.msra.mxu0 %v602
        %1330 = vmatprep.subr.mxu0 %v595
        %1331 = vmatpush2.msra.mxu0 %v594
        %1332 = vmatprep.subr.mxu0 %v587
        %1333 = vmatpush2.msra.mxu0 %v586
        %1334 = vmatprep.subr.mxu0 %v579
        %1335 = vmatpush2.msra.mxu0 %v578
        %1336 = vmatprep.subr.mxu0 %v571
        %1337 = vmatpush2.msra.mxu0 %v570
        %1338 = vmatprep.subr.mxu0 %v563
        %1339 = vmatpush2.msra.mxu0 %v562
        %1340 = vmatprep.subr.mxu0 %v555
        %1341 = vmatpush2.msra.mxu0 %v554
        %1342 = vmatprep.subr.mxu0 %v547
        %1343 = vmatpush2.msra.mxu0 %v546
        %1344 = vmatprep.subr.mxu0 %v539
        %1345 = vmatpush2.msra.mxu0 %v538
        %1346 = vmatprep.subr.mxu0 %v531
        %1347 = vmatpush2.msra.mxu0 %v530
        %1348 = vmatprep.subr.mxu0 %v523
        %1349 = vmatpush2.msra.mxu0 %v522
        %1350 = vmatprep.subr.mxu0 %v515
        %1351 = vmatpush2.msra.mxu0 %v514
        %1352 = vmatprep.subr.mxu0 %v507
        %1353 = vmatpush2.msra.mxu0 %v506
        %1354 = vmatprep.subr.mxu0 %v499
        %1355 = vmatpush2.msra.mxu0 %v498
        %1356 = vmatprep.subr.mxu0 %v491
        %1357 = vmatpush2.msra.mxu0 %v490
        %1358 = vmatprep.mubr.f32.mxu0 %v353
        %1359 = vmatmul.mubr.f32.gmra.mxu0 %v352
        %v1360 = vpop.f32.mrf.mxu0
        %v1361 = vadd.f32 0.0, %v1360
        %v1362 = vpop.f32.mrf.mxu0
        %v1363 = vadd.f32 0.0, %v1362
        %1364 = vdwg.mxu0
        %1365 = vmatprep.subr.mxu0 %v739
        %1366 = vmatpush1.msra.mxu0 %v738
        %1367 = vmatprep.subr.mxu0 %v731
        %1368 = vmatpush1.msra.mxu0 %v730
        %1369 = vmatprep.subr.mxu0 %v723
        %1370 = vmatpush1.msra.mxu0 %v722
        %1371 = vmatprep.subr.mxu0 %v715
        %1372 = vmatpush1.msra.mxu0 %v714
        %1373 = vmatprep.subr.mxu0 %v707
        %1374 = vmatpush1.msra.mxu0 %v706
        %1375 = vmatprep.subr.mxu0 %v699
        %1376 = vmatpush1.msra.mxu0 %v698
        %1377 = vmatprep.subr.mxu0 %v691
        %1378 = vmatpush1.msra.mxu0 %v690
        %1379 = vmatprep.subr.mxu0 %v683
        %1380 = vmatpush1.msra.mxu0 %v682
        %1381 = vmatprep.subr.mxu0 %v675
        %1382 = vmatpush1.msra.mxu0 %v674
        %1383 = vmatprep.subr.mxu0 %v667
        %1384 = vmatpush1.msra.mxu0 %v666
        %1385 = vmatprep.subr.mxu0 %v659
        %1386 = vmatpush1.msra.mxu0 %v658
        %1387 = vmatprep.subr.mxu0 %v651
        %1388 = vmatpush1.msra.mxu0 %v650
        %1389 = vmatprep.subr.mxu0 %v643
        %1390 = vmatpush1.msra.mxu0 %v642
        %1391 = vmatprep.subr.mxu0 %v635
        %1392 = vmatpush1.msra.mxu0 %v634
        %1393 = vmatprep.subr.mxu0 %v627
        %1394 = vmatpush1.msra.mxu0 %v626
        %1395 = vmatprep.subr.mxu0 %v619
        %1396 = vmatpush1.msra.mxu0 %v618
        %1397 = vmatprep.subr.mxu0 %v867
        %1398 = vmatpush2.msra.mxu0 %v866
        %1399 = vmatprep.subr.mxu0 %v859
        %1400 = vmatpush2.msra.mxu0 %v858
        %1401 = vmatprep.subr.mxu0 %v851
        %1402 = vmatpush2.msra.mxu0 %v850
        %1403 = vmatprep.subr.mxu0 %v843
        %1404 = vmatpush2.msra.mxu0 %v842
        %1405 = vmatprep.subr.mxu0 %v835
        %1406 = vmatpush2.msra.mxu0 %v834
        %1407 = vmatprep.subr.mxu0 %v827
        %1408 = vmatpush2.msra.mxu0 %v826
        %1409 = vmatprep.subr.mxu0 %v819
        %1410 = vmatpush2.msra.mxu0 %v818
        %1411 = vmatprep.subr.mxu0 %v811
        %1412 = vmatpush2.msra.mxu0 %v810
        %1413 = vmatprep.subr.mxu0 %v803
        %1414 = vmatpush2.msra.mxu0 %v802
        %1415 = vmatprep.subr.mxu0 %v795
        %1416 = vmatpush2.msra.mxu0 %v794
        %1417 = vmatprep.subr.mxu0 %v787
        %1418 = vmatpush2.msra.mxu0 %v786
        %1419 = vmatprep.subr.mxu0 %v779
        %1420 = vmatpush2.msra.mxu0 %v778
        %1421 = vmatprep.subr.mxu0 %v771
        %1422 = vmatpush2.msra.mxu0 %v770
        %1423 = vmatprep.subr.mxu0 %v763
        %1424 = vmatpush2.msra.mxu0 %v762
        %1425 = vmatprep.subr.mxu0 %v755
        %1426 = vmatpush2.msra.mxu0 %v754
        %1427 = vmatprep.subr.mxu0 %v747
        %1428 = vmatpush2.msra.mxu0 %v746
        %1429 = vmatprep.mubr.f32.mxu0 %v355
        %1430 = vmatmul.mubr.f32.gmra.mxu0 %v354
        %v1431 = vpop.f32.mrf.mxu0
        %v1432 = vadd.f32 %v1361, %v1431
        %v1433 = vpop.f32.mrf.mxu0
        %v1434 = vadd.f32 %v1363, %v1433
        %1435 = vdwg.mxu0
        %v1436 = vadd.f32 %v344, %v1006
        %v1437 = vadd.f32 %v345, %v1008
        %v1438 = vadd.f32 %v346, %v1148
        %v1439 = vadd.f32 %v347, %v1150
        %v1440 = vadd.f32 %v348, %v1290
        %v1441 = vadd.f32 %v349, %v1292
        %v1442 = vadd.f32 %v350, %v1432
        %v1443 = vadd.f32 %v351, %v1434
        %1444 = vst [vmem:[#allocation2] sm:$0xff] %v1436
        %1445 = vst [vmem:[#allocation2 + $0x8] sm:$0xff] %v1437
        %1446 = vst [vmem:[#allocation2 + $0x10] sm:$0xff] %v1438
        %1447 = vst [vmem:[#allocation2 + $0x18] sm:$0xff] %v1439
        %1448 = vst [vmem:[#allocation2 + $0x20] sm:$0xff] %v1440
        %1449 = vst [vmem:[#allocation2 + $0x28] sm:$0xff] %v1441
        %1450 = vst [vmem:[#allocation2 + $0x30] sm:$0xff] %v1442
        %1451 = vst [vmem:[#allocation2 + $0x38] sm:$0xff] %v1443
        %p1452 = scmp.eq.s32.totalorder %s29, 1
        // Predicated region
        $region65: #{tpu_custom_call.1} parent=39 // pred_check
          %p1453 = pneg %p1452
        $region66: #{tpu_custom_call.1} parent=39 // pred_check_branch
          %1455 = sbr.rel (%p1453) target = $region68
        $region67: #{tpu_custom_call.1} parent=39 // pred_region
          %v1456 = vld [vmem:[#allocation2] sm:$0xff]
          %v1457 = vld [vmem:[#allocation2 + $0x8] sm:$0xff]
          %v1458 = vld [vmem:[#allocation2 + $0x10] sm:$0xff]
          %v1459 = vld [vmem:[#allocation2 + $0x18] sm:$0xff]
          %v1460 = vld [vmem:[#allocation2 + $0x20] sm:$0xff]
          %v1461 = vld [vmem:[#allocation2 + $0x28] sm:$0xff]
          %v1462 = vld [vmem:[#allocation2 + $0x30] sm:$0xff]
          %v1463 = vld [vmem:[#allocation2 + $0x38] sm:$0xff]
          %v1464 = vld [vmem:[#allocation8] sm:$0xff]
          %v1466 = vlaneseq
          %v1467 = vshrl.u32 %v1466, 7
          %v1468 = vsub.s32 0, %v1467
          %v1469 = vrot.slane %v1464, %v1468
          %v1470 = vlaneseq
          %v1471 = vshrl.u32 %v1470, 7
          %v1472 = vsub.s32 1, %v1471
          %v1473 = vrot.slane %v1464, %v1472
          %v1474 = vlaneseq
          %v1475 = vshrl.u32 %v1474, 7
          %v1476 = vsub.s32 2, %v1475
          %v1477 = vrot.slane %v1464, %v1476
          %v1478 = vlaneseq
          %v1479 = vshrl.u32 %v1478, 7
          %v1480 = vsub.s32 3, %v1479
          %v1481 = vrot.slane %v1464, %v1480
          %v1482 = vlaneseq
          %v1483 = vshrl.u32 %v1482, 7
          %v1484 = vsub.s32 4, %v1483
          %v1485 = vrot.slane %v1464, %v1484
          %v1486 = vlaneseq
          %v1487 = vshrl.u32 %v1486, 7
          %v1488 = vsub.s32 5, %v1487
          %v1489 = vrot.slane %v1464, %v1488
          %v1490 = vlaneseq
          %v1491 = vshrl.u32 %v1490, 7
          %v1492 = vsub.s32 6, %v1491
          %v1493 = vrot.slane %v1464, %v1492
          %v1494 = vlaneseq
          %v1495 = vshrl.u32 %v1494, 7
          %v1496 = vsub.s32 7, %v1495
          %v1497 = vrot.slane %v1464, %v1496
          %v1506 = vadd.f32 %v1456, %v1469
          %v1507 = vadd.f32 %v1457, %v1473
          %v1508 = vadd.f32 %v1458, %v1477
          %v1509 = vadd.f32 %v1459, %v1481
          %v1510 = vadd.f32 %v1460, %v1485
          %v1511 = vadd.f32 %v1461, %v1489
          %v1512 = vadd.f32 %v1462, %v1493
          %v1513 = vadd.f32 %v1463, %v1497
          %v1514 = vmax.f32 %v1506, 0.0
          %v1515 = vmax.f32 %v1507, 0.0
          %v1516 = vmax.f32 %v1508, 0.0
          %v1517 = vmax.f32 %v1509, 0.0
          %v1518 = vmax.f32 %v1510, 0.0
          %v1519 = vmax.f32 %v1511, 0.0
          %v1520 = vmax.f32 %v1512, 0.0
          %v1521 = vmax.f32 %v1513, 0.0
          %v1522 = vld [vmem:[#allocation9] sm:$0xff]
          %v1523 = vld [vmem:[#allocation9 + $0x8] sm:$0xff]
          %v1524 = vld [vmem:[#allocation9 + $0x10] sm:$0xff]
          %v1525 = vld [vmem:[#allocation9 + $0x18] sm:$0xff]
          %v1526 = vld [vmem:[#allocation9 + $0x20] sm:$0xff]
          %v1527 = vld [vmem:[#allocation9 + $0x28] sm:$0xff]
          %v1528 = vld [vmem:[#allocation9 + $0x30] sm:$0xff]
          %v1529 = vld [vmem:[#allocation9 + $0x38] sm:$0xff]
          %v1530 = vld [vmem:[#allocation9 + $0x40] sm:$0xff]
          %v1531 = vld [vmem:[#allocation9 + $0x48] sm:$0xff]
          %v1532 = vld [vmem:[#allocation9 + $0x50] sm:$0xff]
          %v1533 = vld [vmem:[#allocation9 + $0x58] sm:$0xff]
          %v1534 = vld [vmem:[#allocation9 + $0x60] sm:$0xff]
          %v1535 = vld [vmem:[#allocation9 + $0x68] sm:$0xff]
          %v1536 = vld [vmem:[#allocation9 + $0x70] sm:$0xff]
          %v1537 = vld [vmem:[#allocation9 + $0x78] sm:$0xff]
          %v1538 = vld [vmem:[#allocation9 + $0x80] sm:$0xff]
          %v1539 = vld [vmem:[#allocation9 + $0x88] sm:$0xff]
          %v1540 = vld [vmem:[#allocation9 + $0x90] sm:$0xff]
          %v1541 = vld [vmem:[#allocation9 + $0x98] sm:$0xff]
          %v1542 = vld [vmem:[#allocation9 + $0xa0] sm:$0xff]
          %v1543 = vld [vmem:[#allocation9 + $0xa8] sm:$0xff]
          %v1544 = vld [vmem:[#allocation9 + $0xb0] sm:$0xff]
          %v1545 = vld [vmem:[#allocation9 + $0xb8] sm:$0xff]
          %v1546 = vld [vmem:[#allocation9 + $0xc0] sm:$0xff]
          %v1547 = vld [vmem:[#allocation9 + $0xc8] sm:$0xff]
          %v1548 = vld [vmem:[#allocation9 + $0xd0] sm:$0xff]
          %v1549 = vld [vmem:[#allocation9 + $0xd8] sm:$0xff]
          %v1550 = vld [vmem:[#allocation9 + $0xe0] sm:$0xff]
          %v1551 = vld [vmem:[#allocation9 + $0xe8] sm:$0xff]
          %v1552 = vld [vmem:[#allocation9 + $0xf0] sm:$0xff]
          %v1553 = vld [vmem:[#allocation9 + $0xf8] sm:$0xff]
          %v1554 = vld [vmem:[#allocation9 + $0x100] sm:$0xff]
          %v1555 = vld [vmem:[#allocation9 + $0x108] sm:$0xff]
          %v1556 = vld [vmem:[#allocation9 + $0x110] sm:$0xff]
          %v1557 = vld [vmem:[#allocation9 + $0x118] sm:$0xff]
          %v1558 = vld [vmem:[#allocation9 + $0x120] sm:$0xff]
          %v1559 = vld [vmem:[#allocation9 + $0x128] sm:$0xff]
          %v1560 = vld [vmem:[#allocation9 + $0x130] sm:$0xff]
          %v1561 = vld [vmem:[#allocation9 + $0x138] sm:$0xff]
          %v1562 = vld [vmem:[#allocation9 + $0x140] sm:$0xff]
          %v1563 = vld [vmem:[#allocation9 + $0x148] sm:$0xff]
          %v1564 = vld [vmem:[#allocation9 + $0x150] sm:$0xff]
          %v1565 = vld [vmem:[#allocation9 + $0x158] sm:$0xff]
          %v1566 = vld [vmem:[#allocation9 + $0x160] sm:$0xff]
          %v1567 = vld [vmem:[#allocation9 + $0x168] sm:$0xff]
          %v1568 = vld [vmem:[#allocation9 + $0x170] sm:$0xff]
          %v1569 = vld [vmem:[#allocation9 + $0x178] sm:$0xff]
          %v1570 = vld [vmem:[#allocation9 + $0x180] sm:$0xff]
          %v1571 = vld [vmem:[#allocation9 + $0x188] sm:$0xff]
          %v1572 = vld [vmem:[#allocation9 + $0x190] sm:$0xff]
          %v1573 = vld [vmem:[#allocation9 + $0x198] sm:$0xff]
          %v1574 = vld [vmem:[#allocation9 + $0x1a0] sm:$0xff]
          %v1575 = vld [vmem:[#allocation9 + $0x1a8] sm:$0xff]
          %v1576 = vld [vmem:[#allocation9 + $0x1b0] sm:$0xff]
          %v1577 = vld [vmem:[#allocation9 + $0x1b8] sm:$0xff]
          %v1578 = vld [vmem:[#allocation9 + $0x1c0] sm:$0xff]
          %v1579 = vld [vmem:[#allocation9 + $0x1c8] sm:$0xff]
          %v1580 = vld [vmem:[#allocation9 + $0x1d0] sm:$0xff]
          %v1581 = vld [vmem:[#allocation9 + $0x1d8] sm:$0xff]
          %v1582 = vld [vmem:[#allocation9 + $0x1e0] sm:$0xff]
          %v1583 = vld [vmem:[#allocation9 + $0x1e8] sm:$0xff]
          %v1584 = vld [vmem:[#allocation9 + $0x1f0] sm:$0xff]
          %v1585 = vld [vmem:[#allocation9 + $0x1f8] sm:$0xff]
          %v1586 = vld [vmem:[#allocation9 + $0x200] sm:$0xff]
          %v1587 = vld [vmem:[#allocation9 + $0x208] sm:$0xff]
          %v1588 = vld [vmem:[#allocation9 + $0x210] sm:$0xff]
          %v1589 = vld [vmem:[#allocation9 + $0x218] sm:$0xff]
          %v1590 = vld [vmem:[#allocation9 + $0x220] sm:$0xff]
          %v1591 = vld [vmem:[#allocation9 + $0x228] sm:$0xff]
          %v1592 = vld [vmem:[#allocation9 + $0x230] sm:$0xff]
          %v1593 = vld [vmem:[#allocation9 + $0x238] sm:$0xff]
          %v1594 = vld [vmem:[#allocation9 + $0x240] sm:$0xff]
          %v1595 = vld [vmem:[#allocation9 + $0x248] sm:$0xff]
          %v1596 = vld [vmem:[#allocation9 + $0x250] sm:$0xff]
          %v1597 = vld [vmem:[#allocation9 + $0x258] sm:$0xff]
          %v1598 = vld [vmem:[#allocation9 + $0x260] sm:$0xff]
          %v1599 = vld [vmem:[#allocation9 + $0x268] sm:$0xff]
          %v1600 = vld [vmem:[#allocation9 + $0x270] sm:$0xff]
          %v1601 = vld [vmem:[#allocation9 + $0x278] sm:$0xff]
          %v1602 = vld [vmem:[#allocation9 + $0x280] sm:$0xff]
          %v1603 = vld [vmem:[#allocation9 + $0x288] sm:$0xff]
          %v1604 = vld [vmem:[#allocation9 + $0x290] sm:$0xff]
          %v1605 = vld [vmem:[#allocation9 + $0x298] sm:$0xff]
          %v1606 = vld [vmem:[#allocation9 + $0x2a0] sm:$0xff]
          %v1607 = vld [vmem:[#allocation9 + $0x2a8] sm:$0xff]
          %v1608 = vld [vmem:[#allocation9 + $0x2b0] sm:$0xff]
          %v1609 = vld [vmem:[#allocation9 + $0x2b8] sm:$0xff]
          %v1610 = vld [vmem:[#allocation9 + $0x2c0] sm:$0xff]
          %v1611 = vld [vmem:[#allocation9 + $0x2c8] sm:$0xff]
          %v1612 = vld [vmem:[#allocation9 + $0x2d0] sm:$0xff]
          %v1613 = vld [vmem:[#allocation9 + $0x2d8] sm:$0xff]
          %v1614 = vld [vmem:[#allocation9 + $0x2e0] sm:$0xff]
          %v1615 = vld [vmem:[#allocation9 + $0x2e8] sm:$0xff]
          %v1616 = vld [vmem:[#allocation9 + $0x2f0] sm:$0xff]
          %v1617 = vld [vmem:[#allocation9 + $0x2f8] sm:$0xff]
          %v1618 = vld [vmem:[#allocation9 + $0x300] sm:$0xff]
          %v1619 = vld [vmem:[#allocation9 + $0x308] sm:$0xff]
          %v1620 = vld [vmem:[#allocation9 + $0x310] sm:$0xff]
          %v1621 = vld [vmem:[#allocation9 + $0x318] sm:$0xff]
          %v1622 = vld [vmem:[#allocation9 + $0x320] sm:$0xff]
          %v1623 = vld [vmem:[#allocation9 + $0x328] sm:$0xff]
          %v1624 = vld [vmem:[#allocation9 + $0x330] sm:$0xff]
          %v1625 = vld [vmem:[#allocation9 + $0x338] sm:$0xff]
          %v1626 = vld [vmem:[#allocation9 + $0x340] sm:$0xff]
          %v1627 = vld [vmem:[#allocation9 + $0x348] sm:$0xff]
          %v1628 = vld [vmem:[#allocation9 + $0x350] sm:$0xff]
          %v1629 = vld [vmem:[#allocation9 + $0x358] sm:$0xff]
          %v1630 = vld [vmem:[#allocation9 + $0x360] sm:$0xff]
          %v1631 = vld [vmem:[#allocation9 + $0x368] sm:$0xff]
          %v1632 = vld [vmem:[#allocation9 + $0x370] sm:$0xff]
          %v1633 = vld [vmem:[#allocation9 + $0x378] sm:$0xff]
          %v1634 = vld [vmem:[#allocation9 + $0x380] sm:$0xff]
          %v1635 = vld [vmem:[#allocation9 + $0x388] sm:$0xff]
          %v1636 = vld [vmem:[#allocation9 + $0x390] sm:$0xff]
          %v1637 = vld [vmem:[#allocation9 + $0x398] sm:$0xff]
          %v1638 = vld [vmem:[#allocation9 + $0x3a0] sm:$0xff]
          %v1639 = vld [vmem:[#allocation9 + $0x3a8] sm:$0xff]
          %v1640 = vld [vmem:[#allocation9 + $0x3b0] sm:$0xff]
          %v1641 = vld [vmem:[#allocation9 + $0x3b8] sm:$0xff]
          %v1642 = vld [vmem:[#allocation9 + $0x3c0] sm:$0xff]
          %v1643 = vld [vmem:[#allocation9 + $0x3c8] sm:$0xff]
          %v1644 = vld [vmem:[#allocation9 + $0x3d0] sm:$0xff]
          %v1645 = vld [vmem:[#allocation9 + $0x3d8] sm:$0xff]
          %v1646 = vld [vmem:[#allocation9 + $0x3e0] sm:$0xff]
          %v1647 = vld [vmem:[#allocation9 + $0x3e8] sm:$0xff]
          %v1648 = vld [vmem:[#allocation9 + $0x3f0] sm:$0xff]
          %v1649 = vld [vmem:[#allocation9 + $0x3f8] sm:$0xff]
          %v1650 = vld [vmem:[#allocation11] sm:$0x1]
          %v1652 = vlaneseq
          %v1653 = vshrl.u32 %v1652, 7
          %v1654 = vsub.s32 0, %v1653
          %v1655 = vrot.slane %v1650, %v1654
          %1657 = vmatprep.subr.mxu0 0.0
          %1658 = vmatpush1.msra.mxu0 %v1537
          %1659 = vmatprep.subr.mxu0 0.0
          %1660 = vmatpush1.msra.mxu0 %v1536
          %1661 = vmatprep.subr.mxu0 0.0
          %1662 = vmatpush1.msra.mxu0 %v1535
          %1663 = vmatprep.subr.mxu0 0.0
          %1664 = vmatpush1.msra.mxu0 %v1534
          %1665 = vmatprep.subr.mxu0 0.0
          %1666 = vmatpush1.msra.mxu0 %v1533
          %1667 = vmatprep.subr.mxu0 0.0
          %1668 = vmatpush1.msra.mxu0 %v1532
          %1669 = vmatprep.subr.mxu0 0.0
          %1670 = vmatpush1.msra.mxu0 %v1531
          %1671 = vmatprep.subr.mxu0 0.0
          %1672 = vmatpush1.msra.mxu0 %v1530
          %1673 = vmatprep.subr.mxu0 0.0
          %1674 = vmatpush1.msra.mxu0 %v1529
          %1675 = vmatprep.subr.mxu0 0.0
          %1676 = vmatpush1.msra.mxu0 %v1528
          %1677 = vmatprep.subr.mxu0 0.0
          %1678 = vmatpush1.msra.mxu0 %v1527
          %1679 = vmatprep.subr.mxu0 0.0
          %1680 = vmatpush1.msra.mxu0 %v1526
          %1681 = vmatprep.subr.mxu0 0.0
          %1682 = vmatpush1.msra.mxu0 %v1525
          %1683 = vmatprep.subr.mxu0 0.0
          %1684 = vmatpush1.msra.mxu0 %v1524
          %1685 = vmatprep.subr.mxu0 0.0
          %1686 = vmatpush1.msra.mxu0 %v1523
          %1687 = vmatprep.subr.mxu0 0.0
          %1688 = vmatpush1.msra.mxu0 %v1522
          %1689 = vmatprep.subr.mxu0 0.0
          %1690 = vmatpush2.msra.mxu0 %v1553
          %1691 = vmatprep.subr.mxu0 0.0
          %1692 = vmatpush2.msra.mxu0 %v1552
          %1693 = vmatprep.subr.mxu0 0.0
          %1694 = vmatpush2.msra.mxu0 %v1551
          %1695 = vmatprep.subr.mxu0 0.0
          %1696 = vmatpush2.msra.mxu0 %v1550
          %1697 = vmatprep.subr.mxu0 0.0
          %1698 = vmatpush2.msra.mxu0 %v1549
          %1699 = vmatprep.subr.mxu0 0.0
          %1700 = vmatpush2.msra.mxu0 %v1548
          %1701 = vmatprep.subr.mxu0 0.0
          %1702 = vmatpush2.msra.mxu0 %v1547
          %1703 = vmatprep.subr.mxu0 0.0
          %1704 = vmatpush2.msra.mxu0 %v1546
          %1705 = vmatprep.subr.mxu0 0.0
          %1706 = vmatpush2.msra.mxu0 %v1545
          %1707 = vmatprep.subr.mxu0 0.0
          %1708 = vmatpush2.msra.mxu0 %v1544
          %1709 = vmatprep.subr.mxu0 0.0
          %1710 = vmatpush2.msra.mxu0 %v1543
          %1711 = vmatprep.subr.mxu0 0.0
          %1712 = vmatpush2.msra.mxu0 %v1542
          %1713 = vmatprep.subr.mxu0 0.0
          %1714 = vmatpush2.msra.mxu0 %v1541
          %1715 = vmatprep.subr.mxu0 0.0
          %1716 = vmatpush2.msra.mxu0 %v1540
          %1717 = vmatprep.subr.mxu0 0.0
          %1718 = vmatpush2.msra.mxu0 %v1539
          %1719 = vmatprep.subr.mxu0 0.0
          %1720 = vmatpush2.msra.mxu0 %v1538
          %1721 = vmatprep.mubr.f32.mxu0 %v1515
          %1722 = vmatmul.mubr.f32.gmra.mxu0 %v1514
          %v1723 = vpop.f32.mrf.mxu0
          %v1724 = vadd.f32 %v1655, %v1723
          %v1725 = vpop.f32.mrf.mxu0
          %1726 = vdwg.mxu0
          %1727 = vmatprep.subr.mxu0 0.0
          %1728 = vmatpush1.msra.mxu0 %v1569
          %1729 = vmatprep.subr.mxu0 0.0
          %1730 = vmatpush1.msra.mxu0 %v1568
          %1731 = vmatprep.subr.mxu0 0.0
          %1732 = vmatpush1.msra.mxu0 %v1567
          %1733 = vmatprep.subr.mxu0 0.0
          %1734 = vmatpush1.msra.mxu0 %v1566
          %1735 = vmatprep.subr.mxu0 0.0
          %1736 = vmatpush1.msra.mxu0 %v1565
          %1737 = vmatprep.subr.mxu0 0.0
          %1738 = vmatpush1.msra.mxu0 %v1564
          %1739 = vmatprep.subr.mxu0 0.0
          %1740 = vmatpush1.msra.mxu0 %v1563
          %1741 = vmatprep.subr.mxu0 0.0
          %1742 = vmatpush1.msra.mxu0 %v1562
          %1743 = vmatprep.subr.mxu0 0.0
          %1744 = vmatpush1.msra.mxu0 %v1561
          %1745 = vmatprep.subr.mxu0 0.0
          %1746 = vmatpush1.msra.mxu0 %v1560
          %1747 = vmatprep.subr.mxu0 0.0
          %1748 = vmatpush1.msra.mxu0 %v1559
          %1749 = vmatprep.subr.mxu0 0.0
          %1750 = vmatpush1.msra.mxu0 %v1558
          %1751 = vmatprep.subr.mxu0 0.0
          %1752 = vmatpush1.msra.mxu0 %v1557
          %1753 = vmatprep.subr.mxu0 0.0
          %1754 = vmatpush1.msra.mxu0 %v1556
          %1755 = vmatprep.subr.mxu0 0.0
          %1756 = vmatpush1.msra.mxu0 %v1555
          %1757 = vmatprep.subr.mxu0 0.0
          %1758 = vmatpush1.msra.mxu0 %v1554
          %1759 = vmatprep.subr.mxu0 0.0
          %1760 = vmatpush2.msra.mxu0 %v1585
          %1761 = vmatprep.subr.mxu0 0.0
          %1762 = vmatpush2.msra.mxu0 %v1584
          %1763 = vmatprep.subr.mxu0 0.0
          %1764 = vmatpush2.msra.mxu0 %v1583
          %1765 = vmatprep.subr.mxu0 0.0
          %1766 = vmatpush2.msra.mxu0 %v1582
          %1767 = vmatprep.subr.mxu0 0.0
          %1768 = vmatpush2.msra.mxu0 %v1581
          %1769 = vmatprep.subr.mxu0 0.0
          %1770 = vmatpush2.msra.mxu0 %v1580
          %1771 = vmatprep.subr.mxu0 0.0
          %1772 = vmatpush2.msra.mxu0 %v1579
          %1773 = vmatprep.subr.mxu0 0.0
          %1774 = vmatpush2.msra.mxu0 %v1578
          %1775 = vmatprep.subr.mxu0 0.0
          %1776 = vmatpush2.msra.mxu0 %v1577
          %1777 = vmatprep.subr.mxu0 0.0
          %1778 = vmatpush2.msra.mxu0 %v1576
          %1779 = vmatprep.subr.mxu0 0.0
          %1780 = vmatpush2.msra.mxu0 %v1575
          %1781 = vmatprep.subr.mxu0 0.0
          %1782 = vmatpush2.msra.mxu0 %v1574
          %1783 = vmatprep.subr.mxu0 0.0
          %1784 = vmatpush2.msra.mxu0 %v1573
          %1785 = vmatprep.subr.mxu0 0.0
          %1786 = vmatpush2.msra.mxu0 %v1572
          %1787 = vmatprep.subr.mxu0 0.0
          %1788 = vmatpush2.msra.mxu0 %v1571
          %1789 = vmatprep.subr.mxu0 0.0
          %1790 = vmatpush2.msra.mxu0 %v1570
          %1791 = vmatprep.mubr.f32.mxu0 %v1517
          %1792 = vmatmul.mubr.f32.gmra.mxu0 %v1516
          %v1793 = vpop.f32.mrf.mxu0
          %v1794 = vadd.f32 %v1724, %v1793
          %v1795 = vpop.f32.mrf.mxu0
          %1796 = vdwg.mxu0
          %1797 = vmatprep.subr.mxu0 0.0
          %1798 = vmatpush1.msra.mxu0 %v1601
          %1799 = vmatprep.subr.mxu0 0.0
          %1800 = vmatpush1.msra.mxu0 %v1600
          %1801 = vmatprep.subr.mxu0 0.0
          %1802 = vmatpush1.msra.mxu0 %v1599
          %1803 = vmatprep.subr.mxu0 0.0
          %1804 = vmatpush1.msra.mxu0 %v1598
          %1805 = vmatprep.subr.mxu0 0.0
          %1806 = vmatpush1.msra.mxu0 %v1597
          %1807 = vmatprep.subr.mxu0 0.0
          %1808 = vmatpush1.msra.mxu0 %v1596
          %1809 = vmatprep.subr.mxu0 0.0
          %1810 = vmatpush1.msra.mxu0 %v1595
          %1811 = vmatprep.subr.mxu0 0.0
          %1812 = vmatpush1.msra.mxu0 %v1594
          %1813 = vmatprep.subr.mxu0 0.0
          %1814 = vmatpush1.msra.mxu0 %v1593
          %1815 = vmatprep.subr.mxu0 0.0
          %1816 = vmatpush1.msra.mxu0 %v1592
          %1817 = vmatprep.subr.mxu0 0.0
          %1818 = vmatpush1.msra.mxu0 %v1591
          %1819 = vmatprep.subr.mxu0 0.0
          %1820 = vmatpush1.msra.mxu0 %v1590
          %1821 = vmatprep.subr.mxu0 0.0
          %1822 = vmatpush1.msra.mxu0 %v1589
          %1823 = vmatprep.subr.mxu0 0.0
          %1824 = vmatpush1.msra.mxu0 %v1588
          %1825 = vmatprep.subr.mxu0 0.0
          %1826 = vmatpush1.msra.mxu0 %v1587
          %1827 = vmatprep.subr.mxu0 0.0
          %1828 = vmatpush1.msra.mxu0 %v1586
          %1829 = vmatprep.subr.mxu0 0.0
          %1830 = vmatpush2.msra.mxu0 %v1617
          %1831 = vmatprep.subr.mxu0 0.0
          %1832 = vmatpush2.msra.mxu0 %v1616
          %1833 = vmatprep.subr.mxu0 0.0
          %1834 = vmatpush2.msra.mxu0 %v1615
          %1835 = vmatprep.subr.mxu0 0.0
          %1836 = vmatpush2.msra.mxu0 %v1614
          %1837 = vmatprep.subr.mxu0 0.0
          %1838 = vmatpush2.msra.mxu0 %v1613
          %1839 = vmatprep.subr.mxu0 0.0
          %1840 = vmatpush2.msra.mxu0 %v1612
          %1841 = vmatprep.subr.mxu0 0.0
          %1842 = vmatpush2.msra.mxu0 %v1611
          %1843 = vmatprep.subr.mxu0 0.0
          %1844 = vmatpush2.msra.mxu0 %v1610
          %1845 = vmatprep.subr.mxu0 0.0
          %1846 = vmatpush2.msra.mxu0 %v1609
          %1847 = vmatprep.subr.mxu0 0.0
          %1848 = vmatpush2.msra.mxu0 %v1608
          %1849 = vmatprep.subr.mxu0 0.0
          %1850 = vmatpush2.msra.mxu0 %v1607
          %1851 = vmatprep.subr.mxu0 0.0
          %1852 = vmatpush2.msra.mxu0 %v1606
          %1853 = vmatprep.subr.mxu0 0.0
          %1854 = vmatpush2.msra.mxu0 %v1605
          %1855 = vmatprep.subr.mxu0 0.0
          %1856 = vmatpush2.msra.mxu0 %v1604
          %1857 = vmatprep.subr.mxu0 0.0
          %1858 = vmatpush2.msra.mxu0 %v1603
          %1859 = vmatprep.subr.mxu0 0.0
          %1860 = vmatpush2.msra.mxu0 %v1602
          %1861 = vmatprep.mubr.f32.mxu0 %v1519
          %1862 = vmatmul.mubr.f32.gmra.mxu0 %v1518
          %v1863 = vpop.f32.mrf.mxu0
          %v1864 = vadd.f32 %v1794, %v1863
          %v1865 = vpop.f32.mrf.mxu0
          %1866 = vdwg.mxu0
          %1867 = vmatprep.subr.mxu0 0.0
          %1868 = vmatpush1.msra.mxu0 %v1633
          %1869 = vmatprep.subr.mxu0 0.0
          %1870 = vmatpush1.msra.mxu0 %v1632
          %1871 = vmatprep.subr.mxu0 0.0
          %1872 = vmatpush1.msra.mxu0 %v1631
          %1873 = vmatprep.subr.mxu0 0.0
          %1874 = vmatpush1.msra.mxu0 %v1630
          %1875 = vmatprep.subr.mxu0 0.0
          %1876 = vmatpush1.msra.mxu0 %v1629
          %1877 = vmatprep.subr.mxu0 0.0
          %1878 = vmatpush1.msra.mxu0 %v1628
          %1879 = vmatprep.subr.mxu0 0.0
          %1880 = vmatpush1.msra.mxu0 %v1627
          %1881 = vmatprep.subr.mxu0 0.0
          %1882 = vmatpush1.msra.mxu0 %v1626
          %1883 = vmatprep.subr.mxu0 0.0
          %1884 = vmatpush1.msra.mxu0 %v1625
          %1885 = vmatprep.subr.mxu0 0.0
          %1886 = vmatpush1.msra.mxu0 %v1624
          %1887 = vmatprep.subr.mxu0 0.0
          %1888 = vmatpush1.msra.mxu0 %v1623
          %1889 = vmatprep.subr.mxu0 0.0
          %1890 = vmatpush1.msra.mxu0 %v1622
          %1891 = vmatprep.subr.mxu0 0.0
          %1892 = vmatpush1.msra.mxu0 %v1621
          %1893 = vmatprep.subr.mxu0 0.0
          %1894 = vmatpush1.msra.mxu0 %v1620
          %1895 = vmatprep.subr.mxu0 0.0
          %1896 = vmatpush1.msra.mxu0 %v1619
          %1897 = vmatprep.subr.mxu0 0.0
          %1898 = vmatpush1.msra.mxu0 %v1618
          %1899 = vmatprep.subr.mxu0 0.0
          %1900 = vmatpush2.msra.mxu0 %v1649
          %1901 = vmatprep.subr.mxu0 0.0
          %1902 = vmatpush2.msra.mxu0 %v1648
          %1903 = vmatprep.subr.mxu0 0.0
          %1904 = vmatpush2.msra.mxu0 %v1647
          %1905 = vmatprep.subr.mxu0 0.0
          %1906 = vmatpush2.msra.mxu0 %v1646
          %1907 = vmatprep.subr.mxu0 0.0
          %1908 = vmatpush2.msra.mxu0 %v1645
          %1909 = vmatprep.subr.mxu0 0.0
          %1910 = vmatpush2.msra.mxu0 %v1644
          %1911 = vmatprep.subr.mxu0 0.0
          %1912 = vmatpush2.msra.mxu0 %v1643
          %1913 = vmatprep.subr.mxu0 0.0
          %1914 = vmatpush2.msra.mxu0 %v1642
          %1915 = vmatprep.subr.mxu0 0.0
          %1916 = vmatpush2.msra.mxu0 %v1641
          %1917 = vmatprep.subr.mxu0 0.0
          %1918 = vmatpush2.msra.mxu0 %v1640
          %1919 = vmatprep.subr.mxu0 0.0
          %1920 = vmatpush2.msra.mxu0 %v1639
          %1921 = vmatprep.subr.mxu0 0.0
          %1922 = vmatpush2.msra.mxu0 %v1638
          %1923 = vmatprep.subr.mxu0 0.0
          %1924 = vmatpush2.msra.mxu0 %v1637
          %1925 = vmatprep.subr.mxu0 0.0
          %1926 = vmatpush2.msra.mxu0 %v1636
          %1927 = vmatprep.subr.mxu0 0.0
          %1928 = vmatpush2.msra.mxu0 %v1635
          %1929 = vmatprep.subr.mxu0 0.0
          %1930 = vmatpush2.msra.mxu0 %v1634
          %1931 = vmatprep.mubr.f32.mxu0 %v1521
          %1932 = vmatmul.mubr.f32.gmra.mxu0 %v1520
          %v1933 = vpop.f32.mrf.mxu0
          %v1934 = vadd.f32 %v1864, %v1933
          %v1935 = vpop.f32.mrf.mxu0
          %1936 = vdwg.mxu0
          %1937 = vst [vmem:[#allocation12] sm:$0xff] %v1934
        $region68: #{tpu_custom_call.1} parent=39 // pred_fallthru
          _
        // Predicated region
        $region69: #{tpu_custom_call.1} parent=39 // pred_check
          %p1938 = pneg %p171
        $region70: #{tpu_custom_call.1} parent=39 // pred_check_branch
          %1940 = sbr.rel (%p1938) target = $region72
        $region71: #{tpu_custom_call.1} parent=39 // pred_region
          %s1942 = ssub.s32 128, 128
          %1943 = vsyncadd [#allocation5], %s1942
          %s1944 = smul.addr %s28, 128
          %s1945 = scalar_lea.hbm %s5, %s1944
          %s1947 = sshll.u32 [#allocation12], 4
          %s1948 = int_to_ptr.vmem [resolvable:$true] %s1947
          %1950 = dma.vmem_to_hbm [thread:$0]  %s1948, 128, %s1945, [#allocation5]
        $region72: #{tpu_custom_call.1} parent=39 // pred_fallthru
          _
        // Predicated region
        $region73: #{tpu_custom_call.1} parent=39 // pred_check
          %p1951 = pneg %p171
        $region74: #{tpu_custom_call.1} parent=39 // pred_check_branch
          %1953 = sbr.rel (%p1951) target = $region76
        $region75: #{tpu_custom_call.1} parent=39 // pred_region
          %1954 = dma.done [#allocation5], 128
        $region76: #{tpu_custom_call.1} parent=39 // pred_fallthru
          _
      $region40: #{tpu_custom_call.1} parent=5 // pred_fallthru
        _
      %p1955 = scmp.le.s32.totalorder 2, %s19
      // Predicated region
      $region77: #{tpu_custom_call.1} parent=5 // pred_check
        %p1956 = pneg %p1955
      $region78: #{tpu_custom_call.1} parent=5 // pred_check_branch
        %1958 = sbr.rel (%p1956) target = $region80
      $region79: #{tpu_custom_call.1} parent=5 // pred_region
        %s1959 = ssub.s32 %s19, 2
      $region80: #{tpu_custom_call.1} parent=5 // pred_fallthru
        _
    $region6: #{tpu_custom_call.1} parent=1 // loop_footer
      %s23 = sadd.s32 1, %s19
    $region7: #{tpu_custom_call.1} parent=1 // loop_footer_branch
      %18 = sbr.rel target = $region3
    $region8: #{tpu_custom_call.1} parent=1 // loop_exit
      _
    %1960 = vsyncpa [#allocation4], 1
    %s1961 = scalar_lea.sflag [#allocation4], 1
    %1962 = vsyncpa %s1961, 1
    %1963 = vsyncpa [#allocation7], 1
    %s1964 = scalar_lea.sflag [#allocation7], 1
    %1965 = vsyncpa %s1964, 1
    %1966 = vsyncpa [#allocation10], 1
    %1967 = vsyncpa [#allocation5], 1
    %s1968 = scalar_lea.sflag [#allocation5], 1
    %1969 = vsyncpa %s1968, 1

</llo_original>
